<compile_context>
chip_gen: v6e
topology: v6e:2x2x1
jax: 0.10.0
libtpu: 0.0.40
codegen_flags: <defaults>
</compile_context>

<pallas_src>
import jax
import jax.numpy as jnp
from jax.experimental import pallas as pl
from jax.experimental.pallas import tpu as pltpu

LBDA = 0.1                 # soft-min temperature used by OTAM_cum_dist
INV_LBDA = 1.0 / LBDA


def _round_up(x, m):
    return ((x + m - 1) // m) * m


# ---------------------------------------------------------------------------
# Exp-domain DP used inside the kernel (VPU mul/adds only, carries are
# (Bsub, 128) slabs == whole vregs).
# ---------------------------------------------------------------------------
def _otam_exp_dp(ed_get, L, M_inner, one):
    """OTAM cumulative-distance DP carried in the exp domain.

    ed_get(l, m): exp(-d[l, m] / lambda) at row l, un-padded column m  ((Bsub,128) slab)
    Returns E[-1][-1] = exp(-cum_dists[-1, -1] / lambda)               ((Bsub,128) slab)
    """
    Mp = M_inner + 2  # columns after zero-padding both sides (padded cols: d=0 -> ed=1)

    def ed(l, m):
        if m == 0 or m == Mp - 1:
            return one
        return ed_get(l, m - 1)

    # row 0: cum dist is a plain cumulative sum  ->  E is a running product
    prev = [one]
    for m in range(1, Mp):
        prev.append(ed(0, m) * prev[m - 1])

    # remaining rows
    # TODO(synk): for TS/SS beyond ~16, switch this fully unrolled row loop to a
    # lax.fori_loop over rows carrying the packed prev-row array (bounds code size
    # and live ranges); column recurrence stays unrolled inside the body.
    for l in range(1, L):
        cur = [one]  # column 0 is never written in the reference (cum stays 0 -> E=1)
        # first non-zero column: soft-min over (l-1,0), (l-1,1), (l,0)
        cur.append(ed(l, 1) * (prev[0] + prev[1] + cur[0]))
        # middle columns: soft-min over (l-1,m-1), (l,m-1)
        for m in range(2, Mp - 1):
            cur.append(ed(l, m) * (prev[m - 1] + cur[m - 1]))
        # last column: soft-min over (l-1,-2), (l-1,-1), (l,-2)
        cur.append(ed(l, Mp - 1) * (prev[Mp - 2] + prev[Mp - 1] + cur[Mp - 2]))
        prev = cur

    return prev[Mp - 1]


def _otam_kernel(sim_ref, out_ref, ed_ref):
    # sim_ref: [TS, SS, Bsub, 128] VMEM block (batch on sublanes+lanes)
    # out_ref: [Bsub, 128] VMEM block
    # ed_ref : [TS, SS, Bsub, 128] VMEM scratch holding exp(-dist/lambda)
    TS, SS, Bsub, LANES = sim_ref.shape

    # ed = exp(-dist/lambda) = exp((sim-1)/lambda); written row-by-row into VMEM
    # scratch so the full tile never sits live in the vreg file (no spills).
    for l in range(TS):
        ed_ref[l] = jnp.exp((sim_ref[l] - 1.0) * INV_LBDA)

    one = jnp.ones((Bsub, LANES), jnp.float32)

    # forward direction: rows = query clips, cols = support clips
    e_fwd = _otam_exp_dp(lambda l, m: ed_ref[l, m], TS, SS, one)
    # transposed direction: rows = support clips, cols = query clips
    e_bwd = _otam_exp_dp(lambda l, m: ed_ref[m, l], SS, TS, one)

    # cum = -lambda*log(E);  out = -0.5*(cum_fwd + cum_bwd)
    out_ref[...] = 0.5 * LBDA * (jnp.log(e_fwd) + jnp.log(e_bwd))


def _pick_bsub(TS, SS, n_rows):
    """Sublane rows per block (multiple of 8); 128 batch elems per row."""
    bytes_per_row = TS * SS * 128 * 4
    # cap the input tile at ~1 MiB: double-buffered input + ed scratch then stays
    # far below the default scoped-VMEM budget on v5e (16 MiB) / v6e / v7x (32 MiB).
    cap = max(8, ((1 << 20) // max(bytes_per_row, 1)) // 8 * 8)
    bsub = min(16, cap)  # 16 rows = 2048 batch elems/block, 2 vregs per DP carry
    # keep >= 4 grid steps when the batch is large enough (megacore + pipelining)
    if n_rows >= 32:
        bsub = min(bsub, max(8, (n_rows // 4) // 8 * 8))
    return max(8, bsub)


@jax.jit
def otam_matching(similarity):
    """similarity: [TB, SB, TS, SS] float -> [TB, SB] float32."""
    TB, SB, TS, SS = similarity.shape
    B = TB * SB

    n_rows = (B + 127) // 128
    bsub = _pick_bsub(TS, SS, n_rows)
    padded_rows = _round_up(max(n_rows, bsub), bsub)
    Bpad = padded_rows * 128

    sim_flat = similarity.reshape(B, TS, SS).astype(jnp.float32)
    if Bpad != B:
        # pad with similarity=1 (distance 0) so padded lanes stay finite; sliced off below
        sim_flat = jnp.pad(sim_flat, ((0, Bpad - B), (0, 0), (0, 0)),
                           constant_values=1.0)

    # sublane+lane dense layout [TS, SS, rows, 128]: batch element i sits at
    # (row=i//128, lane=i%128); TS/SS are untiled leading dims so per-cell access
    # in the kernel is a contiguous (Bsub,128) slab.
    # TODO(synk): ideally the producer emits this layout directly (or the transpose
    # is fused into the pallas input) to avoid one extra HBM read+write pass.
    sim_k = jnp.transpose(sim_flat.reshape(padded_rows, 128, TS, SS), (2, 3, 0, 1))

    out = pl.pallas_call(
        _otam_kernel,
        out_shape=jax.ShapeDtypeStruct((padded_rows, 128), jnp.float32),
        grid=(padded_rows // bsub,),
        in_specs=[pl.BlockSpec((TS, SS, bsub, 128), lambda b: (0, 0, b, 0))],
        out_specs=pl.BlockSpec((bsub, 128), lambda b: (b, 0)),
        scratch_shapes=[pltpu.VMEM((TS, SS, bsub, 128), jnp.float32)],
        compiler_params=pltpu.CompilerParams(dimension_semantics=("parallel",)),
    )(sim_k)

    return out.reshape(-1)[:B].reshape(TB, SB)


# ---------------------------------------------------------------------------
# Pure-JAX reference mirroring the PyTorch module exactly (log-domain per-cell
# soft-min), used only for validation.
# ---------------------------------------------------------------------------
def _otam_cum_dist_dp_ref(L, M_inner, get_d, zero):
    Mp = M_inner + 2

    def d(l, m):
        if m == 0 or m == Mp - 1:
            return zero
        return get_d(l, m - 1)

    prev = [zero]
    for m in range(1, Mp):
        prev.append(d(0, m) + prev[m - 1])

    for l in range(1, L):
        cur = [zero]
        cur.append(
            d(l, 1)
            - LBDA * jnp.log(jnp.exp(-prev[0] / LBDA) + jnp.exp(-prev[1] / LBDA)
                             + jnp.exp(-cur[0] / LBDA)))
        for m in range(2, Mp - 1):
            cur.append(
                d(l, m)
                - LBDA * jnp.log(jnp.exp(-prev[m - 1] / LBDA)
                                 + jnp.exp(-cur[m - 1] / LBDA)))
        cur.append(
            d(l, Mp - 1)
            - LBDA * jnp.log(jnp.exp(-prev[Mp - 2] / LBDA)
                             + jnp.exp(-prev[Mp - 1] / LBDA)
                             + jnp.exp(-cur[Mp - 2] / LBDA)))
        prev = cur

    return prev[Mp - 1]


def otam_matching_ref(similarity):
    dist = 1.0 - similarity.astype(jnp.float32)
    TB, SB, TS, SS = dist.shape
    zero = jnp.zeros((TB, SB), jnp.float32)
    fwd = _otam_cum_dist_dp_ref(TS, SS, lambda l, m: dist[:, :, l, m], zero)
    bwd = _otam_cum_dist_dp_ref(SS, TS, lambda l, m: dist[:, :, m, l], zero)
    return -0.5 * (fwd + bwd)


if __name__ == "__main__":
    key = jax.random.PRNGKey(0)
    TB, SB, TS, SS = 2, 4, 8, 8  # query count, support count, query clips, support clips
    # similarity scores in [0.7, 1.0] (keeps the reference's un-stabilized
    # exp(-cum/0.1) well in f32 range, matching its numerics)
    similarity = jax.random.uniform(
        key, (TB, SB, TS, SS), dtype=jnp.float32, minval=0.7, maxval=1.0
    )

    out = otam_matching(similarity)
    out = jax.block_until_ready(out)

    ref = jax.block_until_ready(otam_matching_ref(similarity))
    assert out.shape == (TB, SB)
    assert bool(jnp.all(jnp.isfinite(out)))
    assert bool(jnp.allclose(out, ref, rtol=1e-3, atol=1e-3))

    print("KERNEL_OK")
</pallas_src>

<mosaic_0001>
module attributes {stable_mosaic.version = 11 : i64} {
  func.func @_otam_kernel(%arg0: i32, %arg1: memref<8x8x16x128xf32, #tpu.memory_space<vmem>>, %arg2: memref<16x128xf32, #tpu.memory_space<vmem>>, %arg3: memref<8x8x16x128xf32, #tpu.memory_space<vmem>>) attributes {dimension_semantics = [#tpu.dimension_semantics<parallel>], iteration_bounds = array<i64: 1>, scalar_prefetch = 0 : i64, scratch_operands = 1 : i64, tpu.core_type = #tpu.core_type<tc>, window_params = [{transform_indices = @transform_0, window_bounds = array<i64: 8, 8, 16, 128>}, {transform_indices = @transform_1, window_bounds = array<i64: 16, 128>}]} {
    %c0 = arith.constant 0 : index
    %c0_0 = arith.constant 0 : index
    %c0_1 = arith.constant 0 : index
    %c0_2 = arith.constant 0 : index
    %0 = vector.load %arg1[%c0, %c0_0, %c0_1, %c0_2] : memref<8x8x16x128xf32, #tpu.memory_space<vmem>>, vector<1x8x16x128xf32>
    %1 = vector.shape_cast %0 : vector<1x8x16x128xf32> to vector<8x16x128xf32>
    %cst = arith.constant 1.000000e+00 : f32
    %2 = vector.broadcast %cst : f32 to vector<8x16x128xf32>
    %3 = arith.subf %1, %2 : vector<8x16x128xf32>
    %cst_3 = arith.constant 1.000000e+01 : f32
    %4 = vector.broadcast %cst_3 : f32 to vector<8x16x128xf32>
    %5 = arith.mulf %3, %4 : vector<8x16x128xf32>
    %6 = math.exp %5 : vector<8x16x128xf32>
    %c0_4 = arith.constant 0 : index
    %c0_5 = arith.constant 0 : index
    %c0_6 = arith.constant 0 : index
    %c0_7 = arith.constant 0 : index
    %7 = vector.load %arg3[%c0_4, %c0_5, %c0_6, %c0_7] : memref<8x8x16x128xf32, #tpu.memory_space<vmem>>, vector<1x8x16x128xf32>
    %8 = vector.shape_cast %7 : vector<1x8x16x128xf32> to vector<8x16x128xf32>
    %9 = vector.shape_cast %6 : vector<8x16x128xf32> to vector<1x8x16x128xf32>
    tpu.vector_store %arg3[%c0_4, %c0_5, %c0_6, %c0_7], %9 {strides = array<i32>} : memref<8x8x16x128xf32, #tpu.memory_space<vmem>>, vector<1x8x16x128xf32>,
    %c1 = arith.constant 1 : index
    %c0_8 = arith.constant 0 : index
    %c0_9 = arith.constant 0 : index
    %c0_10 = arith.constant 0 : index
    %10 = vector.load %arg1[%c1, %c0_8, %c0_9, %c0_10] : memref<8x8x16x128xf32, #tpu.memory_space<vmem>>, vector<1x8x16x128xf32>
    %11 = vector.shape_cast %10 : vector<1x8x16x128xf32> to vector<8x16x128xf32>
    %cst_11 = arith.constant 1.000000e+00 : f32
    %12 = vector.broadcast %cst_11 : f32 to vector<8x16x128xf32>
    %13 = arith.subf %11, %12 : vector<8x16x128xf32>
    %cst_12 = arith.constant 1.000000e+01 : f32
    %14 = vector.broadcast %cst_12 : f32 to vector<8x16x128xf32>
    %15 = arith.mulf %13, %14 : vector<8x16x128xf32>
    %16 = math.exp %15 : vector<8x16x128xf32>
    %c1_13 = arith.constant 1 : index
    %c0_14 = arith.constant 0 : index
    %c0_15 = arith.constant 0 : index
    %c0_16 = arith.constant 0 : index
    %17 = vector.load %arg3[%c1_13, %c0_14, %c0_15, %c0_16] : memref<8x8x16x128xf32, #tpu.memory_space<vmem>>, vector<1x8x16x128xf32>
    %18 = vector.shape_cast %17 : vector<1x8x16x128xf32> to vector<8x16x128xf32>
    %19 = vector.shape_cast %16 : vector<8x16x128xf32> to vector<1x8x16x128xf32>
    tpu.vector_store %arg3[%c1_13, %c0_14, %c0_15, %c0_16], %19 {strides = array<i32>} : memref<8x8x16x128xf32, #tpu.memory_space<vmem>>, vector<1x8x16x128xf32>,
    %c2 = arith.constant 2 : index
    %c0_17 = arith.constant 0 : index
    %c0_18 = arith.constant 0 : index
    %c0_19 = arith.constant 0 : index
    %20 = vector.load %arg1[%c2, %c0_17, %c0_18, %c0_19] : memref<8x8x16x128xf32, #tpu.memory_space<vmem>>, vector<1x8x16x128xf32>
    %21 = vector.shape_cast %20 : vector<1x8x16x128xf32> to vector<8x16x128xf32>
    %cst_20 = arith.constant 1.000000e+00 : f32
    %22 = vector.broadcast %cst_20 : f32 to vector<8x16x128xf32>
    %23 = arith.subf %21, %22 : vector<8x16x128xf32>
    %cst_21 = arith.constant 1.000000e+01 : f32
    %24 = vector.broadcast %cst_21 : f32 to vector<8x16x128xf32>
    %25 = arith.mulf %23, %24 : vector<8x16x128xf32>
    %26 = math.exp %25 : vector<8x16x128xf32>
    %c2_22 = arith.constant 2 : index
    %c0_23 = arith.constant 0 : index
    %c0_24 = arith.constant 0 : index
    %c0_25 = arith.constant 0 : index
    %27 = vector.load %arg3[%c2_22, %c0_23, %c0_24, %c0_25] : memref<8x8x16x128xf32, #tpu.memory_space<vmem>>, vector<1x8x16x128xf32>
    %28 = vector.shape_cast %27 : vector<1x8x16x128xf32> to vector<8x16x128xf32>
    %29 = vector.shape_cast %26 : vector<8x16x128xf32> to vector<1x8x16x128xf32>
    tpu.vector_store %arg3[%c2_22, %c0_23, %c0_24, %c0_25], %29 {strides = array<i32>} : memref<8x8x16x128xf32, #tpu.memory_space<vmem>>, vector<1x8x16x128xf32>,
    %c3 = arith.constant 3 : index
    %c0_26 = arith.constant 0 : index
    %c0_27 = arith.constant 0 : index
    %c0_28 = arith.constant 0 : index
    %30 = vector.load %arg1[%c3, %c0_26, %c0_27, %c0_28] : memref<8x8x16x128xf32, #tpu.memory_space<vmem>>, vector<1x8x16x128xf32>
    %31 = vector.shape_cast %30 : vector<1x8x16x128xf32> to vector<8x16x128xf32>
    %cst_29 = arith.constant 1.000000e+00 : f32
    %32 = vector.broadcast %cst_29 : f32 to vector<8x16x128xf32>
    %33 = arith.subf %31, %32 : vector<8x16x128xf32>
    %cst_30 = arith.constant 1.000000e+01 : f32
    %34 = vector.broadcast %cst_30 : f32 to vector<8x16x128xf32>
    %35 = arith.mulf %33, %34 : vector<8x16x128xf32>
    %36 = math.exp %35 : vector<8x16x128xf32>
    %c3_31 = arith.constant 3 : index
    %c0_32 = arith.constant 0 : index
    %c0_33 = arith.constant 0 : index
    %c0_34 = arith.constant 0 : index
    %37 = vector.load %arg3[%c3_31, %c0_32, %c0_33, %c0_34] : memref<8x8x16x128xf32, #tpu.memory_space<vmem>>, vector<1x8x16x128xf32>
    %38 = vector.shape_cast %37 : vector<1x8x16x128xf32> to vector<8x16x128xf32>
    %39 = vector.shape_cast %36 : vector<8x16x128xf32> to vector<1x8x16x128xf32>
    tpu.vector_store %arg3[%c3_31, %c0_32, %c0_33, %c0_34], %39 {strides = array<i32>} : memref<8x8x16x128xf32, #tpu.memory_space<vmem>>, vector<1x8x16x128xf32>,
    %c4 = arith.constant 4 : index
    %c0_35 = arith.constant 0 : index
    %c0_36 = arith.constant 0 : index
    %c0_37 = arith.constant 0 : index
    %40 = vector.load %arg1[%c4, %c0_35, %c0_36, %c0_37] : memref<8x8x16x128xf32, #tpu.memory_space<vmem>>, vector<1x8x16x128xf32>
    %41 = vector.shape_cast %40 : vector<1x8x16x128xf32> to vector<8x16x128xf32>
    %cst_38 = arith.constant 1.000000e+00 : f32
    %42 = vector.broadcast %cst_38 : f32 to vector<8x16x128xf32>
    %43 = arith.subf %41, %42 : vector<8x16x128xf32>
    %cst_39 = arith.constant 1.000000e+01 : f32
    %44 = vector.broadcast %cst_39 : f32 to vector<8x16x128xf32>
    %45 = arith.mulf %43, %44 : vector<8x16x128xf32>
    %46 = math.exp %45 : vector<8x16x128xf32>
    %c4_40 = arith.constant 4 : index
    %c0_41 = arith.constant 0 : index
    %c0_42 = arith.constant 0 : index
    %c0_43 = arith.constant 0 : index
    %47 = vector.load %arg3[%c4_40, %c0_41, %c0_42, %c0_43] : memref<8x8x16x128xf32, #tpu.memory_space<vmem>>, vector<1x8x16x128xf32>
    %48 = vector.shape_cast %47 : vector<1x8x16x128xf32> to vector<8x16x128xf32>
    %49 = vector.shape_cast %46 : vector<8x16x128xf32> to vector<1x8x16x128xf32>
    tpu.vector_store %arg3[%c4_40, %c0_41, %c0_42, %c0_43], %49 {strides = array<i32>} : memref<8x8x16x128xf32, #tpu.memory_space<vmem>>, vector<1x8x16x128xf32>,
    %c5 = arith.constant 5 : index
    %c0_44 = arith.constant 0 : index
    %c0_45 = arith.constant 0 : index
    %c0_46 = arith.constant 0 : index
    %50 = vector.load %arg1[%c5, %c0_44, %c0_45, %c0_46] : memref<8x8x16x128xf32, #tpu.memory_space<vmem>>, vector<1x8x16x128xf32>
    %51 = vector.shape_cast %50 : vector<1x8x16x128xf32> to vector<8x16x128xf32>
    %cst_47 = arith.constant 1.000000e+00 : f32
    %52 = vector.broadcast %cst_47 : f32 to vector<8x16x128xf32>
    %53 = arith.subf %51, %52 : vector<8x16x128xf32>
    %cst_48 = arith.constant 1.000000e+01 : f32
    %54 = vector.broadcast %cst_48 : f32 to vector<8x16x128xf32>
    %55 = arith.mulf %53, %54 : vector<8x16x128xf32>
    %56 = math.exp %55 : vector<8x16x128xf32>
    %c5_49 = arith.constant 5 : index
    %c0_50 = arith.constant 0 : index
    %c0_51 = arith.constant 0 : index
    %c0_52 = arith.constant 0 : index
    %57 = vector.load %arg3[%c5_49, %c0_50, %c0_51, %c0_52] : memref<8x8x16x128xf32, #tpu.memory_space<vmem>>, vector<1x8x16x128xf32>
    %58 = vector.shape_cast %57 : vector<1x8x16x128xf32> to vector<8x16x128xf32>
    %59 = vector.shape_cast %56 : vector<8x16x128xf32> to vector<1x8x16x128xf32>
    tpu.vector_store %arg3[%c5_49, %c0_50, %c0_51, %c0_52], %59 {strides = array<i32>} : memref<8x8x16x128xf32, #tpu.memory_space<vmem>>, vector<1x8x16x128xf32>,
    %c6 = arith.constant 6 : index
    %c0_53 = arith.constant 0 : index
    %c0_54 = arith.constant 0 : index
    %c0_55 = arith.constant 0 : index
    %60 = vector.load %arg1[%c6, %c0_53, %c0_54, %c0_55] : memref<8x8x16x128xf32, #tpu.memory_space<vmem>>, vector<1x8x16x128xf32>
    %61 = vector.shape_cast %60 : vector<1x8x16x128xf32> to vector<8x16x128xf32>
    %cst_56 = arith.constant 1.000000e+00 : f32
    %62 = vector.broadcast %cst_56 : f32 to vector<8x16x128xf32>
    %63 = arith.subf %61, %62 : vector<8x16x128xf32>
    %cst_57 = arith.constant 1.000000e+01 : f32
    %64 = vector.broadcast %cst_57 : f32 to vector<8x16x128xf32>
    %65 = arith.mulf %63, %64 : vector<8x16x128xf32>
    %66 = math.exp %65 : vector<8x16x128xf32>
    %c6_58 = arith.constant 6 : index
    %c0_59 = arith.constant 0 : index
    %c0_60 = arith.constant 0 : index
    %c0_61 = arith.constant 0 : index
    %67 = vector.load %arg3[%c6_58, %c0_59, %c0_60, %c0_61] : memref<8x8x16x128xf32, #tpu.memory_space<vmem>>, vector<1x8x16x128xf32>
    %68 = vector.shape_cast %67 : vector<1x8x16x128xf32> to vector<8x16x128xf32>
    %69 = vector.shape_cast %66 : vector<8x16x128xf32> to vector<1x8x16x128xf32>
    tpu.vector_store %arg3[%c6_58, %c0_59, %c0_60, %c0_61], %69 {strides = array<i32>} : memref<8x8x16x128xf32, #tpu.memory_space<vmem>>, vector<1x8x16x128xf32>,
    %c7 = arith.constant 7 : index
    %c0_62 = arith.constant 0 : index
    %c0_63 = arith.constant 0 : index
    %c0_64 = arith.constant 0 : index
    %70 = vector.load %arg1[%c7, %c0_62, %c0_63, %c0_64] : memref<8x8x16x128xf32, #tpu.memory_space<vmem>>, vector<1x8x16x128xf32>
    %71 = vector.shape_cast %70 : vector<1x8x16x128xf32> to vector<8x16x128xf32>
    %cst_65 = arith.constant 1.000000e+00 : f32
    %72 = vector.broadcast %cst_65 : f32 to vector<8x16x128xf32>
    %73 = arith.subf %71, %72 : vector<8x16x128xf32>
    %cst_66 = arith.constant 1.000000e+01 : f32
    %74 = vector.broadcast %cst_66 : f32 to vector<8x16x128xf32>
    %75 = arith.mulf %73, %74 : vector<8x16x128xf32>
    %76 = math.exp %75 : vector<8x16x128xf32>
    %c7_67 = arith.constant 7 : index
    %c0_68 = arith.constant 0 : index
    %c0_69 = arith.constant 0 : index
    %c0_70 = arith.constant 0 : index
    %77 = vector.load %arg3[%c7_67, %c0_68, %c0_69, %c0_70] : memref<8x8x16x128xf32, #tpu.memory_space<vmem>>, vector<1x8x16x128xf32>
    %78 = vector.shape_cast %77 : vector<1x8x16x128xf32> to vector<8x16x128xf32>
    %79 = vector.shape_cast %76 : vector<8x16x128xf32> to vector<1x8x16x128xf32>
    tpu.vector_store %arg3[%c7_67, %c0_68, %c0_69, %c0_70], %79 {strides = array<i32>} : memref<8x8x16x128xf32, #tpu.memory_space<vmem>>, vector<1x8x16x128xf32>,
    %cst_71 = arith.constant 1.000000e+00 : f32
    %80 = vector.broadcast %cst_71 : f32 to vector<16x128xf32>
    %c0_72 = arith.constant 0 : index
    %c0_73 = arith.constant 0 : index
    %c0_74 = arith.constant 0 : index
    %c0_75 = arith.constant 0 : index
    %81 = vector.load %arg3[%c0_72, %c0_73, %c0_74, %c0_75] : memref<8x8x16x128xf32, #tpu.memory_space<vmem>>, vector<1x1x16x128xf32>
    %82 = vector.shape_cast %81 : vector<1x1x16x128xf32> to vector<16x128xf32>
    %83 = arith.mulf %82, %80 : vector<16x128xf32>
    %c0_76 = arith.constant 0 : index
    %c1_77 = arith.constant 1 : index
    %c0_78 = arith.constant 0 : index
    %c0_79 = arith.constant 0 : index
    %84 = vector.load %arg3[%c0_76, %c1_77, %c0_78, %c0_79] : memref<8x8x16x128xf32, #tpu.memory_space<vmem>>, vector<1x1x16x128xf32>
    %85 = vector.shape_cast %84 : vector<1x1x16x128xf32> to vector<16x128xf32>
    %86 = arith.mulf %85, %83 : vector<16x128xf32>
    %c0_80 = arith.constant 0 : index
    %c2_81 = arith.constant 2 : index
    %c0_82 = arith.constant 0 : index
    %c0_83 = arith.constant 0 : index
    %87 = vector.load %arg3[%c0_80, %c2_81, %c0_82, %c0_83] : memref<8x8x16x128xf32, #tpu.memory_space<vmem>>, vector<1x1x16x128xf32>
    %88 = vector.shape_cast %87 : vector<1x1x16x128xf32> to vector<16x128xf32>
    %89 = arith.mulf %88, %86 : vector<16x128xf32>
    %c0_84 = arith.constant 0 : index
    %c3_85 = arith.constant 3 : index
    %c0_86 = arith.constant 0 : index
    %c0_87 = arith.constant 0 : index
    %90 = vector.load %arg3[%c0_84, %c3_85, %c0_86, %c0_87] : memref<8x8x16x128xf32, #tpu.memory_space<vmem>>, vector<1x1x16x128xf32>
    %91 = vector.shape_cast %90 : vector<1x1x16x128xf32> to vector<16x128xf32>
    %92 = arith.mulf %91, %89 : vector<16x128xf32>
    %c0_88 = arith.constant 0 : index
    %c4_89 = arith.constant 4 : index
    %c0_90 = arith.constant 0 : index
    %c0_91 = arith.constant 0 : index
    %93 = vector.load %arg3[%c0_88, %c4_89, %c0_90, %c0_91] : memref<8x8x16x128xf32, #tpu.memory_space<vmem>>, vector<1x1x16x128xf32>
    %94 = vector.shape_cast %93 : vector<1x1x16x128xf32> to vector<16x128xf32>
    %95 = arith.mulf %94, %92 : vector<16x128xf32>
    %c0_92 = arith.constant 0 : index
    %c5_93 = arith.constant 5 : index
    %c0_94 = arith.constant 0 : index
    %c0_95 = arith.constant 0 : index
    %96 = vector.load %arg3[%c0_92, %c5_93, %c0_94, %c0_95] : memref<8x8x16x128xf32, #tpu.memory_space<vmem>>, vector<1x1x16x128xf32>
    %97 = vector.shape_cast %96 : vector<1x1x16x128xf32> to vector<16x128xf32>
    %98 = arith.mulf %97, %95 : vector<16x128xf32>
    %c0_96 = arith.constant 0 : index
    %c6_97 = arith.constant 6 : index
    %c0_98 = arith.constant 0 : index
    %c0_99 = arith.constant 0 : index
    %99 = vector.load %arg3[%c0_96, %c6_97, %c0_98, %c0_99] : memref<8x8x16x128xf32, #tpu.memory_space<vmem>>, vector<1x1x16x128xf32>
    %100 = vector.shape_cast %99 : vector<1x1x16x128xf32> to vector<16x128xf32>
    %101 = arith.mulf %100, %98 : vector<16x128xf32>
    %c0_100 = arith.constant 0 : index
    %c7_101 = arith.constant 7 : index
    %c0_102 = arith.constant 0 : index
    %c0_103 = arith.constant 0 : index
    %102 = vector.load %arg3[%c0_100, %c7_101, %c0_102, %c0_103] : memref<8x8x16x128xf32, #tpu.memory_space<vmem>>, vector<1x1x16x128xf32>
    %103 = vector.shape_cast %102 : vector<1x1x16x128xf32> to vector<16x128xf32>
    %104 = arith.mulf %103, %101 : vector<16x128xf32>
    %105 = arith.mulf %80, %104 : vector<16x128xf32>
    %c1_104 = arith.constant 1 : index
    %c0_105 = arith.constant 0 : index
    %c0_106 = arith.constant 0 : index
    %c0_107 = arith.constant 0 : index
    %106 = vector.load %arg3[%c1_104, %c0_105, %c0_106, %c0_107] : memref<8x8x16x128xf32, #tpu.memory_space<vmem>>, vector<1x1x16x128xf32>
    %107 = vector.shape_cast %106 : vector<1x1x16x128xf32> to vector<16x128xf32>
    %108 = arith.addf %80, %83 : vector<16x128xf32>
    %109 = arith.addf %108, %80 : vector<16x128xf32>
    %110 = arith.mulf %107, %109 : vector<16x128xf32>
    %c1_108 = arith.constant 1 : index
    %c1_109 = arith.constant 1 : index
    %c0_110 = arith.constant 0 : index
    %c0_111 = arith.constant 0 : index
    %111 = vector.load %arg3[%c1_108, %c1_109, %c0_110, %c0_111] : memref<8x8x16x128xf32, #tpu.memory_space<vmem>>, vector<1x1x16x128xf32>
    %112 = vector.shape_cast %111 : vector<1x1x16x128xf32> to vector<16x128xf32>
    %113 = arith.addf %83, %110 : vector<16x128xf32>
    %114 = arith.mulf %112, %113 : vector<16x128xf32>
    %c1_112 = arith.constant 1 : index
    %c2_113 = arith.constant 2 : index
    %c0_114 = arith.constant 0 : index
    %c0_115 = arith.constant 0 : index
    %115 = vector.load %arg3[%c1_112, %c2_113, %c0_114, %c0_115] : memref<8x8x16x128xf32, #tpu.memory_space<vmem>>, vector<1x1x16x128xf32>
    %116 = vector.shape_cast %115 : vector<1x1x16x128xf32> to vector<16x128xf32>
    %117 = arith.addf %86, %114 : vector<16x128xf32>
    %118 = arith.mulf %116, %117 : vector<16x128xf32>
    %c1_116 = arith.constant 1 : index
    %c3_117 = arith.constant 3 : index
    %c0_118 = arith.constant 0 : index
    %c0_119 = arith.constant 0 : index
    %119 = vector.load %arg3[%c1_116, %c3_117, %c0_118, %c0_119] : memref<8x8x16x128xf32, #tpu.memory_space<vmem>>, vector<1x1x16x128xf32>
    %120 = vector.shape_cast %119 : vector<1x1x16x128xf32> to vector<16x128xf32>
    %121 = arith.addf %89, %118 : vector<16x128xf32>
    %122 = arith.mulf %120, %121 : vector<16x128xf32>
    %c1_120 = arith.constant 1 : index
    %c4_121 = arith.constant 4 : index
    %c0_122 = arith.constant 0 : index
    %c0_123 = arith.constant 0 : index
    %123 = vector.load %arg3[%c1_120, %c4_121, %c0_122, %c0_123] : memref<8x8x16x128xf32, #tpu.memory_space<vmem>>, vector<1x1x16x128xf32>
    %124 = vector.shape_cast %123 : vector<1x1x16x128xf32> to vector<16x128xf32>
    %125 = arith.addf %92, %122 : vector<16x128xf32>
    %126 = arith.mulf %124, %125 : vector<16x128xf32>
    %c1_124 = arith.constant 1 : index
    %c5_125 = arith.constant 5 : index
    %c0_126 = arith.constant 0 : index
    %c0_127 = arith.constant 0 : index
    %127 = vector.load %arg3[%c1_124, %c5_125, %c0_126, %c0_127] : memref<8x8x16x128xf32, #tpu.memory_space<vmem>>, vector<1x1x16x128xf32>
    %128 = vector.shape_cast %127 : vector<1x1x16x128xf32> to vector<16x128xf32>
    %129 = arith.addf %95, %126 : vector<16x128xf32>
    %130 = arith.mulf %128, %129 : vector<16x128xf32>
    %c1_128 = arith.constant 1 : index
    %c6_129 = arith.constant 6 : index
    %c0_130 = arith.constant 0 : index
    %c0_131 = arith.constant 0 : index
    %131 = vector.load %arg3[%c1_128, %c6_129, %c0_130, %c0_131] : memref<8x8x16x128xf32, #tpu.memory_space<vmem>>, vector<1x1x16x128xf32>
    %132 = vector.shape_cast %131 : vector<1x1x16x128xf32> to vector<16x128xf32>
    %133 = arith.addf %98, %130 : vector<16x128xf32>
    %134 = arith.mulf %132, %133 : vector<16x128xf32>
    %c1_132 = arith.constant 1 : index
    %c7_133 = arith.constant 7 : index
    %c0_134 = arith.constant 0 : index
    %c0_135 = arith.constant 0 : index
    %135 = vector.load %arg3[%c1_132, %c7_133, %c0_134, %c0_135] : memref<8x8x16x128xf32, #tpu.memory_space<vmem>>, vector<1x1x16x128xf32>
    %136 = vector.shape_cast %135 : vector<1x1x16x128xf32> to vector<16x128xf32>
    %137 = arith.addf %101, %134 : vector<16x128xf32>
    %138 = arith.mulf %136, %137 : vector<16x128xf32>
    %139 = arith.addf %104, %105 : vector<16x128xf32>
    %140 = arith.addf %139, %138 : vector<16x128xf32>
    %141 = arith.mulf %80, %140 : vector<16x128xf32>
    %c2_136 = arith.constant 2 : index
    %c0_137 = arith.constant 0 : index
    %c0_138 = arith.constant 0 : index
    %c0_139 = arith.constant 0 : index
    %142 = vector.load %arg3[%c2_136, %c0_137, %c0_138, %c0_139] : memref<8x8x16x128xf32, #tpu.memory_space<vmem>>, vector<1x1x16x128xf32>
    %143 = vector.shape_cast %142 : vector<1x1x16x128xf32> to vector<16x128xf32>
    %144 = arith.addf %80, %110 : vector<16x128xf32>
    %145 = arith.addf %144, %80 : vector<16x128xf32>
    %146 = arith.mulf %143, %145 : vector<16x128xf32>
    %c2_140 = arith.constant 2 : index
    %c1_141 = arith.constant 1 : index
    %c0_142 = arith.constant 0 : index
    %c0_143 = arith.constant 0 : index
    %147 = vector.load %arg3[%c2_140, %c1_141, %c0_142, %c0_143] : memref<8x8x16x128xf32, #tpu.memory_space<vmem>>, vector<1x1x16x128xf32>
    %148 = vector.shape_cast %147 : vector<1x1x16x128xf32> to vector<16x128xf32>
    %149 = arith.addf %110, %146 : vector<16x128xf32>
    %150 = arith.mulf %148, %149 : vector<16x128xf32>
    %c2_144 = arith.constant 2 : index
    %c2_145 = arith.constant 2 : index
    %c0_146 = arith.constant 0 : index
    %c0_147 = arith.constant 0 : index
    %151 = vector.load %arg3[%c2_144, %c2_145, %c0_146, %c0_147] : memref<8x8x16x128xf32, #tpu.memory_space<vmem>>, vector<1x1x16x128xf32>
    %152 = vector.shape_cast %151 : vector<1x1x16x128xf32> to vector<16x128xf32>
    %153 = arith.addf %114, %150 : vector<16x128xf32>
    %154 = arith.mulf %152, %153 : vector<16x128xf32>
    %c2_148 = arith.constant 2 : index
    %c3_149 = arith.constant 3 : index
    %c0_150 = arith.constant 0 : index
    %c0_151 = arith.constant 0 : index
    %155 = vector.load %arg3[%c2_148, %c3_149, %c0_150, %c0_151] : memref<8x8x16x128xf32, #tpu.memory_space<vmem>>, vector<1x1x16x128xf32>
    %156 = vector.shape_cast %155 : vector<1x1x16x128xf32> to vector<16x128xf32>
    %157 = arith.addf %118, %154 : vector<16x128xf32>
    %158 = arith.mulf %156, %157 : vector<16x128xf32>
    %c2_152 = arith.constant 2 : index
    %c4_153 = arith.constant 4 : index
    %c0_154 = arith.constant 0 : index
    %c0_155 = arith.constant 0 : index
    %159 = vector.load %arg3[%c2_152, %c4_153, %c0_154, %c0_155] : memref<8x8x16x128xf32, #tpu.memory_space<vmem>>, vector<1x1x16x128xf32>
    %160 = vector.shape_cast %159 : vector<1x1x16x128xf32> to vector<16x128xf32>
    %161 = arith.addf %122, %158 : vector<16x128xf32>
    %162 = arith.mulf %160, %161 : vector<16x128xf32>
    %c2_156 = arith.constant 2 : index
    %c5_157 = arith.constant 5 : index
    %c0_158 = arith.constant 0 : index
    %c0_159 = arith.constant 0 : index
    %163 = vector.load %arg3[%c2_156, %c5_157, %c0_158, %c0_159] : memref<8x8x16x128xf32, #tpu.memory_space<vmem>>, vector<1x1x16x128xf32>
    %164 = vector.shape_cast %163 : vector<1x1x16x128xf32> to vector<16x128xf32>
    %165 = arith.addf %126, %162 : vector<16x128xf32>
    %166 = arith.mulf %164, %165 : vector<16x128xf32>
    %c2_160 = arith.constant 2 : index
    %c6_161 = arith.constant 6 : index
    %c0_162 = arith.constant 0 : index
    %c0_163 = arith.constant 0 : index
    %167 = vector.load %arg3[%c2_160, %c6_161, %c0_162, %c0_163] : memref<8x8x16x128xf32, #tpu.memory_space<vmem>>, vector<1x1x16x128xf32>
    %168 = vector.shape_cast %167 : vector<1x1x16x128xf32> to vector<16x128xf32>
    %169 = arith.addf %130, %166 : vector<16x128xf32>
    %170 = arith.mulf %168, %169 : vector<16x128xf32>
    %c2_164 = arith.constant 2 : index
    %c7_165 = arith.constant 7 : index
    %c0_166 = arith.constant 0 : index
    %c0_167 = arith.constant 0 : index
    %171 = vector.load %arg3[%c2_164, %c7_165, %c0_166, %c0_167] : memref<8x8x16x128xf32, #tpu.memory_space<vmem>>, vector<1x1x16x128xf32>
    %172 = vector.shape_cast %171 : vector<1x1x16x128xf32> to vector<16x128xf32>
    %173 = arith.addf %134, %170 : vector<16x128xf32>
    %174 = arith.mulf %172, %173 : vector<16x128xf32>
    %175 = arith.addf %138, %141 : vector<16x128xf32>
    %176 = arith.addf %175, %174 : vector<16x128xf32>
    %177 = arith.mulf %80, %176 : vector<16x128xf32>
    %c3_168 = arith.constant 3 : index
    %c0_169 = arith.constant 0 : index
    %c0_170 = arith.constant 0 : index
    %c0_171 = arith.constant 0 : index
    %178 = vector.load %arg3[%c3_168, %c0_169, %c0_170, %c0_171] : memref<8x8x16x128xf32, #tpu.memory_space<vmem>>, vector<1x1x16x128xf32>
    %179 = vector.shape_cast %178 : vector<1x1x16x128xf32> to vector<16x128xf32>
    %180 = arith.addf %80, %146 : vector<16x128xf32>
    %181 = arith.addf %180, %80 : vector<16x128xf32>
    %182 = arith.mulf %179, %181 : vector<16x128xf32>
    %c3_172 = arith.constant 3 : index
    %c1_173 = arith.constant 1 : index
    %c0_174 = arith.constant 0 : index
    %c0_175 = arith.constant 0 : index
    %183 = vector.load %arg3[%c3_172, %c1_173, %c0_174, %c0_175] : memref<8x8x16x128xf32, #tpu.memory_space<vmem>>, vector<1x1x16x128xf32>
    %184 = vector.shape_cast %183 : vector<1x1x16x128xf32> to vector<16x128xf32>
    %185 = arith.addf %146, %182 : vector<16x128xf32>
    %186 = arith.mulf %184, %185 : vector<16x128xf32>
    %c3_176 = arith.constant 3 : index
    %c2_177 = arith.constant 2 : index
    %c0_178 = arith.constant 0 : index
    %c0_179 = arith.constant 0 : index
    %187 = vector.load %arg3[%c3_176, %c2_177, %c0_178, %c0_179] : memref<8x8x16x128xf32, #tpu.memory_space<vmem>>, vector<1x1x16x128xf32>
    %188 = vector.shape_cast %187 : vector<1x1x16x128xf32> to vector<16x128xf32>
    %189 = arith.addf %150, %186 : vector<16x128xf32>
    %190 = arith.mulf %188, %189 : vector<16x128xf32>
    %c3_180 = arith.constant 3 : index
    %c3_181 = arith.constant 3 : index
    %c0_182 = arith.constant 0 : index
    %c0_183 = arith.constant 0 : index
    %191 = vector.load %arg3[%c3_180, %c3_181, %c0_182, %c0_183] : memref<8x8x16x128xf32, #tpu.memory_space<vmem>>, vector<1x1x16x128xf32>
    %192 = vector.shape_cast %191 : vector<1x1x16x128xf32> to vector<16x128xf32>
    %193 = arith.addf %154, %190 : vector<16x128xf32>
    %194 = arith.mulf %192, %193 : vector<16x128xf32>
    %c3_184 = arith.constant 3 : index
    %c4_185 = arith.constant 4 : index
    %c0_186 = arith.constant 0 : index
    %c0_187 = arith.constant 0 : index
    %195 = vector.load %arg3[%c3_184, %c4_185, %c0_186, %c0_187] : memref<8x8x16x128xf32, #tpu.memory_space<vmem>>, vector<1x1x16x128xf32>
    %196 = vector.shape_cast %195 : vector<1x1x16x128xf32> to vector<16x128xf32>
    %197 = arith.addf %158, %194 : vector<16x128xf32>
    %198 = arith.mulf %196, %197 : vector<16x128xf32>
    %c3_188 = arith.constant 3 : index
    %c5_189 = arith.constant 5 : index
    %c0_190 = arith.constant 0 : index
    %c0_191 = arith.constant 0 : index
    %199 = vector.load %arg3[%c3_188, %c5_189, %c0_190, %c0_191] : memref<8x8x16x128xf32, #tpu.memory_space<vmem>>, vector<1x1x16x128xf32>
    %200 = vector.shape_cast %199 : vector<1x1x16x128xf32> to vector<16x128xf32>
    %201 = arith.addf %162, %198 : vector<16x128xf32>
    %202 = arith.mulf %200, %201 : vector<16x128xf32>
    %c3_192 = arith.constant 3 : index
    %c6_193 = arith.constant 6 : index
    %c0_194 = arith.constant 0 : index
    %c0_195 = arith.constant 0 : index
    %203 = vector.load %arg3[%c3_192, %c6_193, %c0_194, %c0_195] : memref<8x8x16x128xf32, #tpu.memory_space<vmem>>, vector<1x1x16x128xf32>
    %204 = vector.shape_cast %203 : vector<1x1x16x128xf32> to vector<16x128xf32>
    %205 = arith.addf %166, %202 : vector<16x128xf32>
    %206 = arith.mulf %204, %205 : vector<16x128xf32>
    %c3_196 = arith.constant 3 : index
    %c7_197 = arith.constant 7 : index
    %c0_198 = arith.constant 0 : index
    %c0_199 = arith.constant 0 : index
    %207 = vector.load %arg3[%c3_196, %c7_197, %c0_198, %c0_199] : memref<8x8x16x128xf32, #tpu.memory_space<vmem>>, vector<1x1x16x128xf32>
    %208 = vector.shape_cast %207 : vector<1x1x16x128xf32> to vector<16x128xf32>
    %209 = arith.addf %170, %206 : vector<16x128xf32>
    %210 = arith.mulf %208, %209 : vector<16x128xf32>
    %211 = arith.addf %174, %177 : vector<16x128xf32>
    %212 = arith.addf %211, %210 : vector<16x128xf32>
    %213 = arith.mulf %80, %212 : vector<16x128xf32>
    %c4_200 = arith.constant 4 : index
    %c0_201 = arith.constant 0 : index
    %c0_202 = arith.constant 0 : index
    %c0_203 = arith.constant 0 : index
    %214 = vector.load %arg3[%c4_200, %c0_201, %c0_202, %c0_203] : memref<8x8x16x128xf32, #tpu.memory_space<vmem>>, vector<1x1x16x128xf32>
    %215 = vector.shape_cast %214 : vector<1x1x16x128xf32> to vector<16x128xf32>
    %216 = arith.addf %80, %182 : vector<16x128xf32>
    %217 = arith.addf %216, %80 : vector<16x128xf32>
    %218 = arith.mulf %215, %217 : vector<16x128xf32>
    %c4_204 = arith.constant 4 : index
    %c1_205 = arith.constant 1 : index
    %c0_206 = arith.constant 0 : index
    %c0_207 = arith.constant 0 : index
    %219 = vector.load %arg3[%c4_204, %c1_205, %c0_206, %c0_207] : memref<8x8x16x128xf32, #tpu.memory_space<vmem>>, vector<1x1x16x128xf32>
    %220 = vector.shape_cast %219 : vector<1x1x16x128xf32> to vector<16x128xf32>
    %221 = arith.addf %182, %218 : vector<16x128xf32>
    %222 = arith.mulf %220, %221 : vector<16x128xf32>
    %c4_208 = arith.constant 4 : index
    %c2_209 = arith.constant 2 : index
    %c0_210 = arith.constant 0 : index
    %c0_211 = arith.constant 0 : index
    %223 = vector.load %arg3[%c4_208, %c2_209, %c0_210, %c0_211] : memref<8x8x16x128xf32, #tpu.memory_space<vmem>>, vector<1x1x16x128xf32>
    %224 = vector.shape_cast %223 : vector<1x1x16x128xf32> to vector<16x128xf32>
    %225 = arith.addf %186, %222 : vector<16x128xf32>
    %226 = arith.mulf %224, %225 : vector<16x128xf32>
    %c4_212 = arith.constant 4 : index
    %c3_213 = arith.constant 3 : index
    %c0_214 = arith.constant 0 : index
    %c0_215 = arith.constant 0 : index
    %227 = vector.load %arg3[%c4_212, %c3_213, %c0_214, %c0_215] : memref<8x8x16x128xf32, #tpu.memory_space<vmem>>, vector<1x1x16x128xf32>
    %228 = vector.shape_cast %227 : vector<1x1x16x128xf32> to vector<16x128xf32>
    %229 = arith.addf %190, %226 : vector<16x128xf32>
    %230 = arith.mulf %228, %229 : vector<16x128xf32>
    %c4_216 = arith.constant 4 : index
    %c4_217 = arith.constant 4 : index
    %c0_218 = arith.constant 0 : index
    %c0_219 = arith.constant 0 : index
    %231 = vector.load %arg3[%c4_216, %c4_217, %c0_218, %c0_219] : memref<8x8x16x128xf32, #tpu.memory_space<vmem>>, vector<1x1x16x128xf32>
    %232 = vector.shape_cast %231 : vector<1x1x16x128xf32> to vector<16x128xf32>
    %233 = arith.addf %194, %230 : vector<16x128xf32>
    %234 = arith.mulf %232, %233 : vector<16x128xf32>
    %c4_220 = arith.constant 4 : index
    %c5_221 = arith.constant 5 : index
    %c0_222 = arith.constant 0 : index
    %c0_223 = arith.constant 0 : index
    %235 = vector.load %arg3[%c4_220, %c5_221, %c0_222, %c0_223] : memref<8x8x16x128xf32, #tpu.memory_space<vmem>>, vector<1x1x16x128xf32>
    %236 = vector.shape_cast %235 : vector<1x1x16x128xf32> to vector<16x128xf32>
    %237 = arith.addf %198, %234 : vector<16x128xf32>
    %238 = arith.mulf %236, %237 : vector<16x128xf32>
    %c4_224 = arith.constant 4 : index
    %c6_225 = arith.constant 6 : index
    %c0_226 = arith.constant 0 : index
    %c0_227 = arith.constant 0 : index
    %239 = vector.load %arg3[%c4_224, %c6_225, %c0_226, %c0_227] : memref<8x8x16x128xf32, #tpu.memory_space<vmem>>, vector<1x1x16x128xf32>
    %240 = vector.shape_cast %239 : vector<1x1x16x128xf32> to vector<16x128xf32>
    %241 = arith.addf %202, %238 : vector<16x128xf32>
    %242 = arith.mulf %240, %241 : vector<16x128xf32>
    %c4_228 = arith.constant 4 : index
    %c7_229 = arith.constant 7 : index
    %c0_230 = arith.constant 0 : index
    %c0_231 = arith.constant 0 : index
    %243 = vector.load %arg3[%c4_228, %c7_229, %c0_230, %c0_231] : memref<8x8x16x128xf32, #tpu.memory_space<vmem>>, vector<1x1x16x128xf32>
    %244 = vector.shape_cast %243 : vector<1x1x16x128xf32> to vector<16x128xf32>
    %245 = arith.addf %206, %242 : vector<16x128xf32>
    %246 = arith.mulf %244, %245 : vector<16x128xf32>
    %247 = arith.addf %210, %213 : vector<16x128xf32>
    %248 = arith.addf %247, %246 : vector<16x128xf32>
    %249 = arith.mulf %80, %248 : vector<16x128xf32>
    %c5_232 = arith.constant 5 : index
    %c0_233 = arith.constant 0 : index
    %c0_234 = arith.constant 0 : index
    %c0_235 = arith.constant 0 : index
    %250 = vector.load %arg3[%c5_232, %c0_233, %c0_234, %c0_235] : memref<8x8x16x128xf32, #tpu.memory_space<vmem>>, vector<1x1x16x128xf32>
    %251 = vector.shape_cast %250 : vector<1x1x16x128xf32> to vector<16x128xf32>
    %252 = arith.addf %80, %218 : vector<16x128xf32>
    %253 = arith.addf %252, %80 : vector<16x128xf32>
    %254 = arith.mulf %251, %253 : vector<16x128xf32>
    %c5_236 = arith.constant 5 : index
    %c1_237 = arith.constant 1 : index
    %c0_238 = arith.constant 0 : index
    %c0_239 = arith.constant 0 : index
    %255 = vector.load %arg3[%c5_236, %c1_237, %c0_238, %c0_239] : memref<8x8x16x128xf32, #tpu.memory_space<vmem>>, vector<1x1x16x128xf32>
    %256 = vector.shape_cast %255 : vector<1x1x16x128xf32> to vector<16x128xf32>
    %257 = arith.addf %218, %254 : vector<16x128xf32>
    %258 = arith.mulf %256, %257 : vector<16x128xf32>
    %c5_240 = arith.constant 5 : index
    %c2_241 = arith.constant 2 : index
    %c0_242 = arith.constant 0 : index
    %c0_243 = arith.constant 0 : index
    %259 = vector.load %arg3[%c5_240, %c2_241, %c0_242, %c0_243] : memref<8x8x16x128xf32, #tpu.memory_space<vmem>>, vector<1x1x16x128xf32>
    %260 = vector.shape_cast %259 : vector<1x1x16x128xf32> to vector<16x128xf32>
    %261 = arith.addf %222, %258 : vector<16x128xf32>
    %262 = arith.mulf %260, %261 : vector<16x128xf32>
    %c5_244 = arith.constant 5 : index
    %c3_245 = arith.constant 3 : index
    %c0_246 = arith.constant 0 : index
    %c0_247 = arith.constant 0 : index
    %263 = vector.load %arg3[%c5_244, %c3_245, %c0_246, %c0_247] : memref<8x8x16x128xf32, #tpu.memory_space<vmem>>, vector<1x1x16x128xf32>
    %264 = vector.shape_cast %263 : vector<1x1x16x128xf32> to vector<16x128xf32>
    %265 = arith.addf %226, %262 : vector<16x128xf32>
    %266 = arith.mulf %264, %265 : vector<16x128xf32>
    %c5_248 = arith.constant 5 : index
    %c4_249 = arith.constant 4 : index
    %c0_250 = arith.constant 0 : index
    %c0_251 = arith.constant 0 : index
    %267 = vector.load %arg3[%c5_248, %c4_249, %c0_250, %c0_251] : memref<8x8x16x128xf32, #tpu.memory_space<vmem>>, vector<1x1x16x128xf32>
    %268 = vector.shape_cast %267 : vector<1x1x16x128xf32> to vector<16x128xf32>
    %269 = arith.addf %230, %266 : vector<16x128xf32>
    %270 = arith.mulf %268, %269 : vector<16x128xf32>
    %c5_252 = arith.constant 5 : index
    %c5_253 = arith.constant 5 : index
    %c0_254 = arith.constant 0 : index
    %c0_255 = arith.constant 0 : index
    %271 = vector.load %arg3[%c5_252, %c5_253, %c0_254, %c0_255] : memref<8x8x16x128xf32, #tpu.memory_space<vmem>>, vector<1x1x16x128xf32>
    %272 = vector.shape_cast %271 : vector<1x1x16x128xf32> to vector<16x128xf32>
    %273 = arith.addf %234, %270 : vector<16x128xf32>
    %274 = arith.mulf %272, %273 : vector<16x128xf32>
    %c5_256 = arith.constant 5 : index
    %c6_257 = arith.constant 6 : index
    %c0_258 = arith.constant 0 : index
    %c0_259 = arith.constant 0 : index
    %275 = vector.load %arg3[%c5_256, %c6_257, %c0_258, %c0_259] : memref<8x8x16x128xf32, #tpu.memory_space<vmem>>, vector<1x1x16x128xf32>
    %276 = vector.shape_cast %275 : vector<1x1x16x128xf32> to vector<16x128xf32>
    %277 = arith.addf %238, %274 : vector<16x128xf32>
    %278 = arith.mulf %276, %277 : vector<16x128xf32>
    %c5_260 = arith.constant 5 : index
    %c7_261 = arith.constant 7 : index
    %c0_262 = arith.constant 0 : index
    %c0_263 = arith.constant 0 : index
    %279 = vector.load %arg3[%c5_260, %c7_261, %c0_262, %c0_263] : memref<8x8x16x128xf32, #tpu.memory_space<vmem>>, vector<1x1x16x128xf32>
    %280 = vector.shape_cast %279 : vector<1x1x16x128xf32> to vector<16x128xf32>
    %281 = arith.addf %242, %278 : vector<16x128xf32>
    %282 = arith.mulf %280, %281 : vector<16x128xf32>
    %283 = arith.addf %246, %249 : vector<16x128xf32>
    %284 = arith.addf %283, %282 : vector<16x128xf32>
    %285 = arith.mulf %80, %284 : vector<16x128xf32>
    %c6_264 = arith.constant 6 : index
    %c0_265 = arith.constant 0 : index
    %c0_266 = arith.constant 0 : index
    %c0_267 = arith.constant 0 : index
    %286 = vector.load %arg3[%c6_264, %c0_265, %c0_266, %c0_267] : memref<8x8x16x128xf32, #tpu.memory_space<vmem>>, vector<1x1x16x128xf32>
    %287 = vector.shape_cast %286 : vector<1x1x16x128xf32> to vector<16x128xf32>
    %288 = arith.addf %80, %254 : vector<16x128xf32>
    %289 = arith.addf %288, %80 : vector<16x128xf32>
    %290 = arith.mulf %287, %289 : vector<16x128xf32>
    %c6_268 = arith.constant 6 : index
    %c1_269 = arith.constant 1 : index
    %c0_270 = arith.constant 0 : index
    %c0_271 = arith.constant 0 : index
    %291 = vector.load %arg3[%c6_268, %c1_269, %c0_270, %c0_271] : memref<8x8x16x128xf32, #tpu.memory_space<vmem>>, vector<1x1x16x128xf32>
    %292 = vector.shape_cast %291 : vector<1x1x16x128xf32> to vector<16x128xf32>
    %293 = arith.addf %254, %290 : vector<16x128xf32>
    %294 = arith.mulf %292, %293 : vector<16x128xf32>
    %c6_272 = arith.constant 6 : index
    %c2_273 = arith.constant 2 : index
    %c0_274 = arith.constant 0 : index
    %c0_275 = arith.constant 0 : index
    %295 = vector.load %arg3[%c6_272, %c2_273, %c0_274, %c0_275] : memref<8x8x16x128xf32, #tpu.memory_space<vmem>>, vector<1x1x16x128xf32>
    %296 = vector.shape_cast %295 : vector<1x1x16x128xf32> to vector<16x128xf32>
    %297 = arith.addf %258, %294 : vector<16x128xf32>
    %298 = arith.mulf %296, %297 : vector<16x128xf32>
    %c6_276 = arith.constant 6 : index
    %c3_277 = arith.constant 3 : index
    %c0_278 = arith.constant 0 : index
    %c0_279 = arith.constant 0 : index
    %299 = vector.load %arg3[%c6_276, %c3_277, %c0_278, %c0_279] : memref<8x8x16x128xf32, #tpu.memory_space<vmem>>, vector<1x1x16x128xf32>
    %300 = vector.shape_cast %299 : vector<1x1x16x128xf32> to vector<16x128xf32>
    %301 = arith.addf %262, %298 : vector<16x128xf32>
    %302 = arith.mulf %300, %301 : vector<16x128xf32>
    %c6_280 = arith.constant 6 : index
    %c4_281 = arith.constant 4 : index
    %c0_282 = arith.constant 0 : index
    %c0_283 = arith.constant 0 : index
    %303 = vector.load %arg3[%c6_280, %c4_281, %c0_282, %c0_283] : memref<8x8x16x128xf32, #tpu.memory_space<vmem>>, vector<1x1x16x128xf32>
    %304 = vector.shape_cast %303 : vector<1x1x16x128xf32> to vector<16x128xf32>
    %305 = arith.addf %266, %302 : vector<16x128xf32>
    %306 = arith.mulf %304, %305 : vector<16x128xf32>
    %c6_284 = arith.constant 6 : index
    %c5_285 = arith.constant 5 : index
    %c0_286 = arith.constant 0 : index
    %c0_287 = arith.constant 0 : index
    %307 = vector.load %arg3[%c6_284, %c5_285, %c0_286, %c0_287] : memref<8x8x16x128xf32, #tpu.memory_space<vmem>>, vector<1x1x16x128xf32>
    %308 = vector.shape_cast %307 : vector<1x1x16x128xf32> to vector<16x128xf32>
    %309 = arith.addf %270, %306 : vector<16x128xf32>
    %310 = arith.mulf %308, %309 : vector<16x128xf32>
    %c6_288 = arith.constant 6 : index
    %c6_289 = arith.constant 6 : index
    %c0_290 = arith.constant 0 : index
    %c0_291 = arith.constant 0 : index
    %311 = vector.load %arg3[%c6_288, %c6_289, %c0_290, %c0_291] : memref<8x8x16x128xf32, #tpu.memory_space<vmem>>, vector<1x1x16x128xf32>
    %312 = vector.shape_cast %311 : vector<1x1x16x128xf32> to vector<16x128xf32>
    %313 = arith.addf %274, %310 : vector<16x128xf32>
    %314 = arith.mulf %312, %313 : vector<16x128xf32>
    %c6_292 = arith.constant 6 : index
    %c7_293 = arith.constant 7 : index
    %c0_294 = arith.constant 0 : index
    %c0_295 = arith.constant 0 : index
    %315 = vector.load %arg3[%c6_292, %c7_293, %c0_294, %c0_295] : memref<8x8x16x128xf32, #tpu.memory_space<vmem>>, vector<1x1x16x128xf32>
    %316 = vector.shape_cast %315 : vector<1x1x16x128xf32> to vector<16x128xf32>
    %317 = arith.addf %278, %314 : vector<16x128xf32>
    %318 = arith.mulf %316, %317 : vector<16x128xf32>
    %319 = arith.addf %282, %285 : vector<16x128xf32>
    %320 = arith.addf %319, %318 : vector<16x128xf32>
    %321 = arith.mulf %80, %320 : vector<16x128xf32>
    %c7_296 = arith.constant 7 : index
    %c0_297 = arith.constant 0 : index
    %c0_298 = arith.constant 0 : index
    %c0_299 = arith.constant 0 : index
    %322 = vector.load %arg3[%c7_296, %c0_297, %c0_298, %c0_299] : memref<8x8x16x128xf32, #tpu.memory_space<vmem>>, vector<1x1x16x128xf32>
    %323 = vector.shape_cast %322 : vector<1x1x16x128xf32> to vector<16x128xf32>
    %324 = arith.addf %80, %290 : vector<16x128xf32>
    %325 = arith.addf %324, %80 : vector<16x128xf32>
    %326 = arith.mulf %323, %325 : vector<16x128xf32>
    %c7_300 = arith.constant 7 : index
    %c1_301 = arith.constant 1 : index
    %c0_302 = arith.constant 0 : index
    %c0_303 = arith.constant 0 : index
    %327 = vector.load %arg3[%c7_300, %c1_301, %c0_302, %c0_303] : memref<8x8x16x128xf32, #tpu.memory_space<vmem>>, vector<1x1x16x128xf32>
    %328 = vector.shape_cast %327 : vector<1x1x16x128xf32> to vector<16x128xf32>
    %329 = arith.addf %290, %326 : vector<16x128xf32>
    %330 = arith.mulf %328, %329 : vector<16x128xf32>
    %c7_304 = arith.constant 7 : index
    %c2_305 = arith.constant 2 : index
    %c0_306 = arith.constant 0 : index
    %c0_307 = arith.constant 0 : index
    %331 = vector.load %arg3[%c7_304, %c2_305, %c0_306, %c0_307] : memref<8x8x16x128xf32, #tpu.memory_space<vmem>>, vector<1x1x16x128xf32>
    %332 = vector.shape_cast %331 : vector<1x1x16x128xf32> to vector<16x128xf32>
    %333 = arith.addf %294, %330 : vector<16x128xf32>
    %334 = arith.mulf %332, %333 : vector<16x128xf32>
    %c7_308 = arith.constant 7 : index
    %c3_309 = arith.constant 3 : index
    %c0_310 = arith.constant 0 : index
    %c0_311 = arith.constant 0 : index
    %335 = vector.load %arg3[%c7_308, %c3_309, %c0_310, %c0_311] : memref<8x8x16x128xf32, #tpu.memory_space<vmem>>, vector<1x1x16x128xf32>
    %336 = vector.shape_cast %335 : vector<1x1x16x128xf32> to vector<16x128xf32>
    %337 = arith.addf %298, %334 : vector<16x128xf32>
    %338 = arith.mulf %336, %337 : vector<16x128xf32>
    %c7_312 = arith.constant 7 : index
    %c4_313 = arith.constant 4 : index
    %c0_314 = arith.constant 0 : index
    %c0_315 = arith.constant 0 : index
    %339 = vector.load %arg3[%c7_312, %c4_313, %c0_314, %c0_315] : memref<8x8x16x128xf32, #tpu.memory_space<vmem>>, vector<1x1x16x128xf32>
    %340 = vector.shape_cast %339 : vector<1x1x16x128xf32> to vector<16x128xf32>
    %341 = arith.addf %302, %338 : vector<16x128xf32>
    %342 = arith.mulf %340, %341 : vector<16x128xf32>
    %c7_316 = arith.constant 7 : index
    %c5_317 = arith.constant 5 : index
    %c0_318 = arith.constant 0 : index
    %c0_319 = arith.constant 0 : index
    %343 = vector.load %arg3[%c7_316, %c5_317, %c0_318, %c0_319] : memref<8x8x16x128xf32, #tpu.memory_space<vmem>>, vector<1x1x16x128xf32>
    %344 = vector.shape_cast %343 : vector<1x1x16x128xf32> to vector<16x128xf32>
    %345 = arith.addf %306, %342 : vector<16x128xf32>
    %346 = arith.mulf %344, %345 : vector<16x128xf32>
    %c7_320 = arith.constant 7 : index
    %c6_321 = arith.constant 6 : index
    %c0_322 = arith.constant 0 : index
    %c0_323 = arith.constant 0 : index
    %347 = vector.load %arg3[%c7_320, %c6_321, %c0_322, %c0_323] : memref<8x8x16x128xf32, #tpu.memory_space<vmem>>, vector<1x1x16x128xf32>
    %348 = vector.shape_cast %347 : vector<1x1x16x128xf32> to vector<16x128xf32>
    %349 = arith.addf %310, %346 : vector<16x128xf32>
    %350 = arith.mulf %348, %349 : vector<16x128xf32>
    %c7_324 = arith.constant 7 : index
    %c7_325 = arith.constant 7 : index
    %c0_326 = arith.constant 0 : index
    %c0_327 = arith.constant 0 : index
    %351 = vector.load %arg3[%c7_324, %c7_325, %c0_326, %c0_327] : memref<8x8x16x128xf32, #tpu.memory_space<vmem>>, vector<1x1x16x128xf32>
    %352 = vector.shape_cast %351 : vector<1x1x16x128xf32> to vector<16x128xf32>
    %353 = arith.addf %314, %350 : vector<16x128xf32>
    %354 = arith.mulf %352, %353 : vector<16x128xf32>
    %355 = arith.addf %318, %321 : vector<16x128xf32>
    %356 = arith.addf %355, %354 : vector<16x128xf32>
    %357 = arith.mulf %80, %356 : vector<16x128xf32>
    %c0_328 = arith.constant 0 : index
    %c0_329 = arith.constant 0 : index
    %c0_330 = arith.constant 0 : index
    %c0_331 = arith.constant 0 : index
    %358 = vector.load %arg3[%c0_328, %c0_329, %c0_330, %c0_331] : memref<8x8x16x128xf32, #tpu.memory_space<vmem>>, vector<1x1x16x128xf32>
    %359 = vector.shape_cast %358 : vector<1x1x16x128xf32> to vector<16x128xf32>
    %360 = arith.mulf %359, %80 : vector<16x128xf32>
    %c1_332 = arith.constant 1 : index
    %c0_333 = arith.constant 0 : index
    %c0_334 = arith.constant 0 : index
    %c0_335 = arith.constant 0 : index
    %361 = vector.load %arg3[%c1_332, %c0_333, %c0_334, %c0_335] : memref<8x8x16x128xf32, #tpu.memory_space<vmem>>, vector<1x1x16x128xf32>
    %362 = vector.shape_cast %361 : vector<1x1x16x128xf32> to vector<16x128xf32>
    %363 = arith.mulf %362, %360 : vector<16x128xf32>
    %c2_336 = arith.constant 2 : index
    %c0_337 = arith.constant 0 : index
    %c0_338 = arith.constant 0 : index
    %c0_339 = arith.constant 0 : index
    %364 = vector.load %arg3[%c2_336, %c0_337, %c0_338, %c0_339] : memref<8x8x16x128xf32, #tpu.memory_space<vmem>>, vector<1x1x16x128xf32>
    %365 = vector.shape_cast %364 : vector<1x1x16x128xf32> to vector<16x128xf32>
    %366 = arith.mulf %365, %363 : vector<16x128xf32>
    %c3_340 = arith.constant 3 : index
    %c0_341 = arith.constant 0 : index
    %c0_342 = arith.constant 0 : index
    %c0_343 = arith.constant 0 : index
    %367 = vector.load %arg3[%c3_340, %c0_341, %c0_342, %c0_343] : memref<8x8x16x128xf32, #tpu.memory_space<vmem>>, vector<1x1x16x128xf32>
    %368 = vector.shape_cast %367 : vector<1x1x16x128xf32> to vector<16x128xf32>
    %369 = arith.mulf %368, %366 : vector<16x128xf32>
    %c4_344 = arith.constant 4 : index
    %c0_345 = arith.constant 0 : index
    %c0_346 = arith.constant 0 : index
    %c0_347 = arith.constant 0 : index
    %370 = vector.load %arg3[%c4_344, %c0_345, %c0_346, %c0_347] : memref<8x8x16x128xf32, #tpu.memory_space<vmem>>, vector<1x1x16x128xf32>
    %371 = vector.shape_cast %370 : vector<1x1x16x128xf32> to vector<16x128xf32>
    %372 = arith.mulf %371, %369 : vector<16x128xf32>
    %c5_348 = arith.constant 5 : index
    %c0_349 = arith.constant 0 : index
    %c0_350 = arith.constant 0 : index
    %c0_351 = arith.constant 0 : index
    %373 = vector.load %arg3[%c5_348, %c0_349, %c0_350, %c0_351] : memref<8x8x16x128xf32, #tpu.memory_space<vmem>>, vector<1x1x16x128xf32>
    %374 = vector.shape_cast %373 : vector<1x1x16x128xf32> to vector<16x128xf32>
    %375 = arith.mulf %374, %372 : vector<16x128xf32>
    %c6_352 = arith.constant 6 : index
    %c0_353 = arith.constant 0 : index
    %c0_354 = arith.constant 0 : index
    %c0_355 = arith.constant 0 : index
    %376 = vector.load %arg3[%c6_352, %c0_353, %c0_354, %c0_355] : memref<8x8x16x128xf32, #tpu.memory_space<vmem>>, vector<1x1x16x128xf32>
    %377 = vector.shape_cast %376 : vector<1x1x16x128xf32> to vector<16x128xf32>
    %378 = arith.mulf %377, %375 : vector<16x128xf32>
    %c7_356 = arith.constant 7 : index
    %c0_357 = arith.constant 0 : index
    %c0_358 = arith.constant 0 : index
    %c0_359 = arith.constant 0 : index
    %379 = vector.load %arg3[%c7_356, %c0_357, %c0_358, %c0_359] : memref<8x8x16x128xf32, #tpu.memory_space<vmem>>, vector<1x1x16x128xf32>
    %380 = vector.shape_cast %379 : vector<1x1x16x128xf32> to vector<16x128xf32>
    %381 = arith.mulf %380, %378 : vector<16x128xf32>
    %382 = arith.mulf %80, %381 : vector<16x128xf32>
    %c0_360 = arith.constant 0 : index
    %c1_361 = arith.constant 1 : index
    %c0_362 = arith.constant 0 : index
    %c0_363 = arith.constant 0 : index
    %383 = vector.load %arg3[%c0_360, %c1_361, %c0_362, %c0_363] : memref<8x8x16x128xf32, #tpu.memory_space<vmem>>, vector<1x1x16x128xf32>
    %384 = vector.shape_cast %383 : vector<1x1x16x128xf32> to vector<16x128xf32>
    %385 = arith.addf %80, %360 : vector<16x128xf32>
    %386 = arith.addf %385, %80 : vector<16x128xf32>
    %387 = arith.mulf %384, %386 : vector<16x128xf32>
    %c1_364 = arith.constant 1 : index
    %c1_365 = arith.constant 1 : index
    %c0_366 = arith.constant 0 : index
    %c0_367 = arith.constant 0 : index
    %388 = vector.load %arg3[%c1_364, %c1_365, %c0_366, %c0_367] : memref<8x8x16x128xf32, #tpu.memory_space<vmem>>, vector<1x1x16x128xf32>
    %389 = vector.shape_cast %388 : vector<1x1x16x128xf32> to vector<16x128xf32>
    %390 = arith.addf %360, %387 : vector<16x128xf32>
    %391 = arith.mulf %389, %390 : vector<16x128xf32>
    %c2_368 = arith.constant 2 : index
    %c1_369 = arith.constant 1 : index
    %c0_370 = arith.constant 0 : index
    %c0_371 = arith.constant 0 : index
    %392 = vector.load %arg3[%c2_368, %c1_369, %c0_370, %c0_371] : memref<8x8x16x128xf32, #tpu.memory_space<vmem>>, vector<1x1x16x128xf32>
    %393 = vector.shape_cast %392 : vector<1x1x16x128xf32> to vector<16x128xf32>
    %394 = arith.addf %363, %391 : vector<16x128xf32>
    %395 = arith.mulf %393, %394 : vector<16x128xf32>
    %c3_372 = arith.constant 3 : index
    %c1_373 = arith.constant 1 : index
    %c0_374 = arith.constant 0 : index
    %c0_375 = arith.constant 0 : index
    %396 = vector.load %arg3[%c3_372, %c1_373, %c0_374, %c0_375] : memref<8x8x16x128xf32, #tpu.memory_space<vmem>>, vector<1x1x16x128xf32>
    %397 = vector.shape_cast %396 : vector<1x1x16x128xf32> to vector<16x128xf32>
    %398 = arith.addf %366, %395 : vector<16x128xf32>
    %399 = arith.mulf %397, %398 : vector<16x128xf32>
    %c4_376 = arith.constant 4 : index
    %c1_377 = arith.constant 1 : index
    %c0_378 = arith.constant 0 : index
    %c0_379 = arith.constant 0 : index
    %400 = vector.load %arg3[%c4_376, %c1_377, %c0_378, %c0_379] : memref<8x8x16x128xf32, #tpu.memory_space<vmem>>, vector<1x1x16x128xf32>
    %401 = vector.shape_cast %400 : vector<1x1x16x128xf32> to vector<16x128xf32>
    %402 = arith.addf %369, %399 : vector<16x128xf32>
    %403 = arith.mulf %401, %402 : vector<16x128xf32>
    %c5_380 = arith.constant 5 : index
    %c1_381 = arith.constant 1 : index
    %c0_382 = arith.constant 0 : index
    %c0_383 = arith.constant 0 : index
    %404 = vector.load %arg3[%c5_380, %c1_381, %c0_382, %c0_383] : memref<8x8x16x128xf32, #tpu.memory_space<vmem>>, vector<1x1x16x128xf32>
    %405 = vector.shape_cast %404 : vector<1x1x16x128xf32> to vector<16x128xf32>
    %406 = arith.addf %372, %403 : vector<16x128xf32>
    %407 = arith.mulf %405, %406 : vector<16x128xf32>
    %c6_384 = arith.constant 6 : index
    %c1_385 = arith.constant 1 : index
    %c0_386 = arith.constant 0 : index
    %c0_387 = arith.constant 0 : index
    %408 = vector.load %arg3[%c6_384, %c1_385, %c0_386, %c0_387] : memref<8x8x16x128xf32, #tpu.memory_space<vmem>>, vector<1x1x16x128xf32>
    %409 = vector.shape_cast %408 : vector<1x1x16x128xf32> to vector<16x128xf32>
    %410 = arith.addf %375, %407 : vector<16x128xf32>
    %411 = arith.mulf %409, %410 : vector<16x128xf32>
    %c7_388 = arith.constant 7 : index
    %c1_389 = arith.constant 1 : index
    %c0_390 = arith.constant 0 : index
    %c0_391 = arith.constant 0 : index
    %412 = vector.load %arg3[%c7_388, %c1_389, %c0_390, %c0_391] : memref<8x8x16x128xf32, #tpu.memory_space<vmem>>, vector<1x1x16x128xf32>
    %413 = vector.shape_cast %412 : vector<1x1x16x128xf32> to vector<16x128xf32>
    %414 = arith.addf %378, %411 : vector<16x128xf32>
    %415 = arith.mulf %413, %414 : vector<16x128xf32>
    %416 = arith.addf %381, %382 : vector<16x128xf32>
    %417 = arith.addf %416, %415 : vector<16x128xf32>
    %418 = arith.mulf %80, %417 : vector<16x128xf32>
    %c0_392 = arith.constant 0 : index
    %c2_393 = arith.constant 2 : index
    %c0_394 = arith.constant 0 : index
    %c0_395 = arith.constant 0 : index
    %419 = vector.load %arg3[%c0_392, %c2_393, %c0_394, %c0_395] : memref<8x8x16x128xf32, #tpu.memory_space<vmem>>, vector<1x1x16x128xf32>
    %420 = vector.shape_cast %419 : vector<1x1x16x128xf32> to vector<16x128xf32>
    %421 = arith.addf %80, %387 : vector<16x128xf32>
    %422 = arith.addf %421, %80 : vector<16x128xf32>
    %423 = arith.mulf %420, %422 : vector<16x128xf32>
    %c1_396 = arith.constant 1 : index
    %c2_397 = arith.constant 2 : index
    %c0_398 = arith.constant 0 : index
    %c0_399 = arith.constant 0 : index
    %424 = vector.load %arg3[%c1_396, %c2_397, %c0_398, %c0_399] : memref<8x8x16x128xf32, #tpu.memory_space<vmem>>, vector<1x1x16x128xf32>
    %425 = vector.shape_cast %424 : vector<1x1x16x128xf32> to vector<16x128xf32>
    %426 = arith.addf %387, %423 : vector<16x128xf32>
    %427 = arith.mulf %425, %426 : vector<16x128xf32>
    %c2_400 = arith.constant 2 : index
    %c2_401 = arith.constant 2 : index
    %c0_402 = arith.constant 0 : index
    %c0_403 = arith.constant 0 : index
    %428 = vector.load %arg3[%c2_400, %c2_401, %c0_402, %c0_403] : memref<8x8x16x128xf32, #tpu.memory_space<vmem>>, vector<1x1x16x128xf32>
    %429 = vector.shape_cast %428 : vector<1x1x16x128xf32> to vector<16x128xf32>
    %430 = arith.addf %391, %427 : vector<16x128xf32>
    %431 = arith.mulf %429, %430 : vector<16x128xf32>
    %c3_404 = arith.constant 3 : index
    %c2_405 = arith.constant 2 : index
    %c0_406 = arith.constant 0 : index
    %c0_407 = arith.constant 0 : index
    %432 = vector.load %arg3[%c3_404, %c2_405, %c0_406, %c0_407] : memref<8x8x16x128xf32, #tpu.memory_space<vmem>>, vector<1x1x16x128xf32>
    %433 = vector.shape_cast %432 : vector<1x1x16x128xf32> to vector<16x128xf32>
    %434 = arith.addf %395, %431 : vector<16x128xf32>
    %435 = arith.mulf %433, %434 : vector<16x128xf32>
    %c4_408 = arith.constant 4 : index
    %c2_409 = arith.constant 2 : index
    %c0_410 = arith.constant 0 : index
    %c0_411 = arith.constant 0 : index
    %436 = vector.load %arg3[%c4_408, %c2_409, %c0_410, %c0_411] : memref<8x8x16x128xf32, #tpu.memory_space<vmem>>, vector<1x1x16x128xf32>
    %437 = vector.shape_cast %436 : vector<1x1x16x128xf32> to vector<16x128xf32>
    %438 = arith.addf %399, %435 : vector<16x128xf32>
    %439 = arith.mulf %437, %438 : vector<16x128xf32>
    %c5_412 = arith.constant 5 : index
    %c2_413 = arith.constant 2 : index
    %c0_414 = arith.constant 0 : index
    %c0_415 = arith.constant 0 : index
    %440 = vector.load %arg3[%c5_412, %c2_413, %c0_414, %c0_415] : memref<8x8x16x128xf32, #tpu.memory_space<vmem>>, vector<1x1x16x128xf32>
    %441 = vector.shape_cast %440 : vector<1x1x16x128xf32> to vector<16x128xf32>
    %442 = arith.addf %403, %439 : vector<16x128xf32>
    %443 = arith.mulf %441, %442 : vector<16x128xf32>
    %c6_416 = arith.constant 6 : index
    %c2_417 = arith.constant 2 : index
    %c0_418 = arith.constant 0 : index
    %c0_419 = arith.constant 0 : index
    %444 = vector.load %arg3[%c6_416, %c2_417, %c0_418, %c0_419] : memref<8x8x16x128xf32, #tpu.memory_space<vmem>>, vector<1x1x16x128xf32>
    %445 = vector.shape_cast %444 : vector<1x1x16x128xf32> to vector<16x128xf32>
    %446 = arith.addf %407, %443 : vector<16x128xf32>
    %447 = arith.mulf %445, %446 : vector<16x128xf32>
    %c7_420 = arith.constant 7 : index
    %c2_421 = arith.constant 2 : index
    %c0_422 = arith.constant 0 : index
    %c0_423 = arith.constant 0 : index
    %448 = vector.load %arg3[%c7_420, %c2_421, %c0_422, %c0_423] : memref<8x8x16x128xf32, #tpu.memory_space<vmem>>, vector<1x1x16x128xf32>
    %449 = vector.shape_cast %448 : vector<1x1x16x128xf32> to vector<16x128xf32>
    %450 = arith.addf %411, %447 : vector<16x128xf32>
    %451 = arith.mulf %449, %450 : vector<16x128xf32>
    %452 = arith.addf %415, %418 : vector<16x128xf32>
    %453 = arith.addf %452, %451 : vector<16x128xf32>
    %454 = arith.mulf %80, %453 : vector<16x128xf32>
    %c0_424 = arith.constant 0 : index
    %c3_425 = arith.constant 3 : index
    %c0_426 = arith.constant 0 : index
    %c0_427 = arith.constant 0 : index
    %455 = vector.load %arg3[%c0_424, %c3_425, %c0_426, %c0_427] : memref<8x8x16x128xf32, #tpu.memory_space<vmem>>, vector<1x1x16x128xf32>
    %456 = vector.shape_cast %455 : vector<1x1x16x128xf32> to vector<16x128xf32>
    %457 = arith.addf %80, %423 : vector<16x128xf32>
    %458 = arith.addf %457, %80 : vector<16x128xf32>
    %459 = arith.mulf %456, %458 : vector<16x128xf32>
    %c1_428 = arith.constant 1 : index
    %c3_429 = arith.constant 3 : index
    %c0_430 = arith.constant 0 : index
    %c0_431 = arith.constant 0 : index
    %460 = vector.load %arg3[%c1_428, %c3_429, %c0_430, %c0_431] : memref<8x8x16x128xf32, #tpu.memory_space<vmem>>, vector<1x1x16x128xf32>
    %461 = vector.shape_cast %460 : vector<1x1x16x128xf32> to vector<16x128xf32>
    %462 = arith.addf %423, %459 : vector<16x128xf32>
    %463 = arith.mulf %461, %462 : vector<16x128xf32>
    %c2_432 = arith.constant 2 : index
    %c3_433 = arith.constant 3 : index
    %c0_434 = arith.constant 0 : index
    %c0_435 = arith.constant 0 : index
    %464 = vector.load %arg3[%c2_432, %c3_433, %c0_434, %c0_435] : memref<8x8x16x128xf32, #tpu.memory_space<vmem>>, vector<1x1x16x128xf32>
    %465 = vector.shape_cast %464 : vector<1x1x16x128xf32> to vector<16x128xf32>
    %466 = arith.addf %427, %463 : vector<16x128xf32>
    %467 = arith.mulf %465, %466 : vector<16x128xf32>
    %c3_436 = arith.constant 3 : index
    %c3_437 = arith.constant 3 : index
    %c0_438 = arith.constant 0 : index
    %c0_439 = arith.constant 0 : index
    %468 = vector.load %arg3[%c3_436, %c3_437, %c0_438, %c0_439] : memref<8x8x16x128xf32, #tpu.memory_space<vmem>>, vector<1x1x16x128xf32>
    %469 = vector.shape_cast %468 : vector<1x1x16x128xf32> to vector<16x128xf32>
    %470 = arith.addf %431, %467 : vector<16x128xf32>
    %471 = arith.mulf %469, %470 : vector<16x128xf32>
    %c4_440 = arith.constant 4 : index
    %c3_441 = arith.constant 3 : index
    %c0_442 = arith.constant 0 : index
    %c0_443 = arith.constant 0 : index
    %472 = vector.load %arg3[%c4_440, %c3_441, %c0_442, %c0_443] : memref<8x8x16x128xf32, #tpu.memory_space<vmem>>, vector<1x1x16x128xf32>
    %473 = vector.shape_cast %472 : vector<1x1x16x128xf32> to vector<16x128xf32>
    %474 = arith.addf %435, %471 : vector<16x128xf32>
    %475 = arith.mulf %473, %474 : vector<16x128xf32>
    %c5_444 = arith.constant 5 : index
    %c3_445 = arith.constant 3 : index
    %c0_446 = arith.constant 0 : index
    %c0_447 = arith.constant 0 : index
    %476 = vector.load %arg3[%c5_444, %c3_445, %c0_446, %c0_447] : memref<8x8x16x128xf32, #tpu.memory_space<vmem>>, vector<1x1x16x128xf32>
    %477 = vector.shape_cast %476 : vector<1x1x16x128xf32> to vector<16x128xf32>
    %478 = arith.addf %439, %475 : vector<16x128xf32>
    %479 = arith.mulf %477, %478 : vector<16x128xf32>
    %c6_448 = arith.constant 6 : index
    %c3_449 = arith.constant 3 : index
    %c0_450 = arith.constant 0 : index
    %c0_451 = arith.constant 0 : index
    %480 = vector.load %arg3[%c6_448, %c3_449, %c0_450, %c0_451] : memref<8x8x16x128xf32, #tpu.memory_space<vmem>>, vector<1x1x16x128xf32>
    %481 = vector.shape_cast %480 : vector<1x1x16x128xf32> to vector<16x128xf32>
    %482 = arith.addf %443, %479 : vector<16x128xf32>
    %483 = arith.mulf %481, %482 : vector<16x128xf32>
    %c7_452 = arith.constant 7 : index
    %c3_453 = arith.constant 3 : index
    %c0_454 = arith.constant 0 : index
    %c0_455 = arith.constant 0 : index
    %484 = vector.load %arg3[%c7_452, %c3_453, %c0_454, %c0_455] : memref<8x8x16x128xf32, #tpu.memory_space<vmem>>, vector<1x1x16x128xf32>
    %485 = vector.shape_cast %484 : vector<1x1x16x128xf32> to vector<16x128xf32>
    %486 = arith.addf %447, %483 : vector<16x128xf32>
    %487 = arith.mulf %485, %486 : vector<16x128xf32>
    %488 = arith.addf %451, %454 : vector<16x128xf32>
    %489 = arith.addf %488, %487 : vector<16x128xf32>
    %490 = arith.mulf %80, %489 : vector<16x128xf32>
    %c0_456 = arith.constant 0 : index
    %c4_457 = arith.constant 4 : index
    %c0_458 = arith.constant 0 : index
    %c0_459 = arith.constant 0 : index
    %491 = vector.load %arg3[%c0_456, %c4_457, %c0_458, %c0_459] : memref<8x8x16x128xf32, #tpu.memory_space<vmem>>, vector<1x1x16x128xf32>
    %492 = vector.shape_cast %491 : vector<1x1x16x128xf32> to vector<16x128xf32>
    %493 = arith.addf %80, %459 : vector<16x128xf32>
    %494 = arith.addf %493, %80 : vector<16x128xf32>
    %495 = arith.mulf %492, %494 : vector<16x128xf32>
    %c1_460 = arith.constant 1 : index
    %c4_461 = arith.constant 4 : index
    %c0_462 = arith.constant 0 : index
    %c0_463 = arith.constant 0 : index
    %496 = vector.load %arg3[%c1_460, %c4_461, %c0_462, %c0_463] : memref<8x8x16x128xf32, #tpu.memory_space<vmem>>, vector<1x1x16x128xf32>
    %497 = vector.shape_cast %496 : vector<1x1x16x128xf32> to vector<16x128xf32>
    %498 = arith.addf %459, %495 : vector<16x128xf32>
    %499 = arith.mulf %497, %498 : vector<16x128xf32>
    %c2_464 = arith.constant 2 : index
    %c4_465 = arith.constant 4 : index
    %c0_466 = arith.constant 0 : index
    %c0_467 = arith.constant 0 : index
    %500 = vector.load %arg3[%c2_464, %c4_465, %c0_466, %c0_467] : memref<8x8x16x128xf32, #tpu.memory_space<vmem>>, vector<1x1x16x128xf32>
    %501 = vector.shape_cast %500 : vector<1x1x16x128xf32> to vector<16x128xf32>
    %502 = arith.addf %463, %499 : vector<16x128xf32>
    %503 = arith.mulf %501, %502 : vector<16x128xf32>
    %c3_468 = arith.constant 3 : index
    %c4_469 = arith.constant 4 : index
    %c0_470 = arith.constant 0 : index
    %c0_471 = arith.constant 0 : index
    %504 = vector.load %arg3[%c3_468, %c4_469, %c0_470, %c0_471] : memref<8x8x16x128xf32, #tpu.memory_space<vmem>>, vector<1x1x16x128xf32>
    %505 = vector.shape_cast %504 : vector<1x1x16x128xf32> to vector<16x128xf32>
    %506 = arith.addf %467, %503 : vector<16x128xf32>
    %507 = arith.mulf %505, %506 : vector<16x128xf32>
    %c4_472 = arith.constant 4 : index
    %c4_473 = arith.constant 4 : index
    %c0_474 = arith.constant 0 : index
    %c0_475 = arith.constant 0 : index
    %508 = vector.load %arg3[%c4_472, %c4_473, %c0_474, %c0_475] : memref<8x8x16x128xf32, #tpu.memory_space<vmem>>, vector<1x1x16x128xf32>
    %509 = vector.shape_cast %508 : vector<1x1x16x128xf32> to vector<16x128xf32>
    %510 = arith.addf %471, %507 : vector<16x128xf32>
    %511 = arith.mulf %509, %510 : vector<16x128xf32>
    %c5_476 = arith.constant 5 : index
    %c4_477 = arith.constant 4 : index
    %c0_478 = arith.constant 0 : index
    %c0_479 = arith.constant 0 : index
    %512 = vector.load %arg3[%c5_476, %c4_477, %c0_478, %c0_479] : memref<8x8x16x128xf32, #tpu.memory_space<vmem>>, vector<1x1x16x128xf32>
    %513 = vector.shape_cast %512 : vector<1x1x16x128xf32> to vector<16x128xf32>
    %514 = arith.addf %475, %511 : vector<16x128xf32>
    %515 = arith.mulf %513, %514 : vector<16x128xf32>
    %c6_480 = arith.constant 6 : index
    %c4_481 = arith.constant 4 : index
    %c0_482 = arith.constant 0 : index
    %c0_483 = arith.constant 0 : index
    %516 = vector.load %arg3[%c6_480, %c4_481, %c0_482, %c0_483] : memref<8x8x16x128xf32, #tpu.memory_space<vmem>>, vector<1x1x16x128xf32>
    %517 = vector.shape_cast %516 : vector<1x1x16x128xf32> to vector<16x128xf32>
    %518 = arith.addf %479, %515 : vector<16x128xf32>
    %519 = arith.mulf %517, %518 : vector<16x128xf32>
    %c7_484 = arith.constant 7 : index
    %c4_485 = arith.constant 4 : index
    %c0_486 = arith.constant 0 : index
    %c0_487 = arith.constant 0 : index
    %520 = vector.load %arg3[%c7_484, %c4_485, %c0_486, %c0_487] : memref<8x8x16x128xf32, #tpu.memory_space<vmem>>, vector<1x1x16x128xf32>
    %521 = vector.shape_cast %520 : vector<1x1x16x128xf32> to vector<16x128xf32>
    %522 = arith.addf %483, %519 : vector<16x128xf32>
    %523 = arith.mulf %521, %522 : vector<16x128xf32>
    %524 = arith.addf %487, %490 : vector<16x128xf32>
    %525 = arith.addf %524, %523 : vector<16x128xf32>
    %526 = arith.mulf %80, %525 : vector<16x128xf32>
    %c0_488 = arith.constant 0 : index
    %c5_489 = arith.constant 5 : index
    %c0_490 = arith.constant 0 : index
    %c0_491 = arith.constant 0 : index
    %527 = vector.load %arg3[%c0_488, %c5_489, %c0_490, %c0_491] : memref<8x8x16x128xf32, #tpu.memory_space<vmem>>, vector<1x1x16x128xf32>
    %528 = vector.shape_cast %527 : vector<1x1x16x128xf32> to vector<16x128xf32>
    %529 = arith.addf %80, %495 : vector<16x128xf32>
    %530 = arith.addf %529, %80 : vector<16x128xf32>
    %531 = arith.mulf %528, %530 : vector<16x128xf32>
    %c1_492 = arith.constant 1 : index
    %c5_493 = arith.constant 5 : index
    %c0_494 = arith.constant 0 : index
    %c0_495 = arith.constant 0 : index
    %532 = vector.load %arg3[%c1_492, %c5_493, %c0_494, %c0_495] : memref<8x8x16x128xf32, #tpu.memory_space<vmem>>, vector<1x1x16x128xf32>
    %533 = vector.shape_cast %532 : vector<1x1x16x128xf32> to vector<16x128xf32>
    %534 = arith.addf %495, %531 : vector<16x128xf32>
    %535 = arith.mulf %533, %534 : vector<16x128xf32>
    %c2_496 = arith.constant 2 : index
    %c5_497 = arith.constant 5 : index
    %c0_498 = arith.constant 0 : index
    %c0_499 = arith.constant 0 : index
    %536 = vector.load %arg3[%c2_496, %c5_497, %c0_498, %c0_499] : memref<8x8x16x128xf32, #tpu.memory_space<vmem>>, vector<1x1x16x128xf32>
    %537 = vector.shape_cast %536 : vector<1x1x16x128xf32> to vector<16x128xf32>
    %538 = arith.addf %499, %535 : vector<16x128xf32>
    %539 = arith.mulf %537, %538 : vector<16x128xf32>
    %c3_500 = arith.constant 3 : index
    %c5_501 = arith.constant 5 : index
    %c0_502 = arith.constant 0 : index
    %c0_503 = arith.constant 0 : index
    %540 = vector.load %arg3[%c3_500, %c5_501, %c0_502, %c0_503] : memref<8x8x16x128xf32, #tpu.memory_space<vmem>>, vector<1x1x16x128xf32>
    %541 = vector.shape_cast %540 : vector<1x1x16x128xf32> to vector<16x128xf32>
    %542 = arith.addf %503, %539 : vector<16x128xf32>
    %543 = arith.mulf %541, %542 : vector<16x128xf32>
    %c4_504 = arith.constant 4 : index
    %c5_505 = arith.constant 5 : index
    %c0_506 = arith.constant 0 : index
    %c0_507 = arith.constant 0 : index
    %544 = vector.load %arg3[%c4_504, %c5_505, %c0_506, %c0_507] : memref<8x8x16x128xf32, #tpu.memory_space<vmem>>, vector<1x1x16x128xf32>
    %545 = vector.shape_cast %544 : vector<1x1x16x128xf32> to vector<16x128xf32>
    %546 = arith.addf %507, %543 : vector<16x128xf32>
    %547 = arith.mulf %545, %546 : vector<16x128xf32>
    %c5_508 = arith.constant 5 : index
    %c5_509 = arith.constant 5 : index
    %c0_510 = arith.constant 0 : index
    %c0_511 = arith.constant 0 : index
    %548 = vector.load %arg3[%c5_508, %c5_509, %c0_510, %c0_511] : memref<8x8x16x128xf32, #tpu.memory_space<vmem>>, vector<1x1x16x128xf32>
    %549 = vector.shape_cast %548 : vector<1x1x16x128xf32> to vector<16x128xf32>
    %550 = arith.addf %511, %547 : vector<16x128xf32>
    %551 = arith.mulf %549, %550 : vector<16x128xf32>
    %c6_512 = arith.constant 6 : index
    %c5_513 = arith.constant 5 : index
    %c0_514 = arith.constant 0 : index
    %c0_515 = arith.constant 0 : index
    %552 = vector.load %arg3[%c6_512, %c5_513, %c0_514, %c0_515] : memref<8x8x16x128xf32, #tpu.memory_space<vmem>>, vector<1x1x16x128xf32>
    %553 = vector.shape_cast %552 : vector<1x1x16x128xf32> to vector<16x128xf32>
    %554 = arith.addf %515, %551 : vector<16x128xf32>
    %555 = arith.mulf %553, %554 : vector<16x128xf32>
    %c7_516 = arith.constant 7 : index
    %c5_517 = arith.constant 5 : index
    %c0_518 = arith.constant 0 : index
    %c0_519 = arith.constant 0 : index
    %556 = vector.load %arg3[%c7_516, %c5_517, %c0_518, %c0_519] : memref<8x8x16x128xf32, #tpu.memory_space<vmem>>, vector<1x1x16x128xf32>
    %557 = vector.shape_cast %556 : vector<1x1x16x128xf32> to vector<16x128xf32>
    %558 = arith.addf %519, %555 : vector<16x128xf32>
    %559 = arith.mulf %557, %558 : vector<16x128xf32>
    %560 = arith.addf %523, %526 : vector<16x128xf32>
    %561 = arith.addf %560, %559 : vector<16x128xf32>
    %562 = arith.mulf %80, %561 : vector<16x128xf32>
    %c0_520 = arith.constant 0 : index
    %c6_521 = arith.constant 6 : index
    %c0_522 = arith.constant 0 : index
    %c0_523 = arith.constant 0 : index
    %563 = vector.load %arg3[%c0_520, %c6_521, %c0_522, %c0_523] : memref<8x8x16x128xf32, #tpu.memory_space<vmem>>, vector<1x1x16x128xf32>
    %564 = vector.shape_cast %563 : vector<1x1x16x128xf32> to vector<16x128xf32>
    %565 = arith.addf %80, %531 : vector<16x128xf32>
    %566 = arith.addf %565, %80 : vector<16x128xf32>
    %567 = arith.mulf %564, %566 : vector<16x128xf32>
    %c1_524 = arith.constant 1 : index
    %c6_525 = arith.constant 6 : index
    %c0_526 = arith.constant 0 : index
    %c0_527 = arith.constant 0 : index
    %568 = vector.load %arg3[%c1_524, %c6_525, %c0_526, %c0_527] : memref<8x8x16x128xf32, #tpu.memory_space<vmem>>, vector<1x1x16x128xf32>
    %569 = vector.shape_cast %568 : vector<1x1x16x128xf32> to vector<16x128xf32>
    %570 = arith.addf %531, %567 : vector<16x128xf32>
    %571 = arith.mulf %569, %570 : vector<16x128xf32>
    %c2_528 = arith.constant 2 : index
    %c6_529 = arith.constant 6 : index
    %c0_530 = arith.constant 0 : index
    %c0_531 = arith.constant 0 : index
    %572 = vector.load %arg3[%c2_528, %c6_529, %c0_530, %c0_531] : memref<8x8x16x128xf32, #tpu.memory_space<vmem>>, vector<1x1x16x128xf32>
    %573 = vector.shape_cast %572 : vector<1x1x16x128xf32> to vector<16x128xf32>
    %574 = arith.addf %535, %571 : vector<16x128xf32>
    %575 = arith.mulf %573, %574 : vector<16x128xf32>
    %c3_532 = arith.constant 3 : index
    %c6_533 = arith.constant 6 : index
    %c0_534 = arith.constant 0 : index
    %c0_535 = arith.constant 0 : index
    %576 = vector.load %arg3[%c3_532, %c6_533, %c0_534, %c0_535] : memref<8x8x16x128xf32, #tpu.memory_space<vmem>>, vector<1x1x16x128xf32>
    %577 = vector.shape_cast %576 : vector<1x1x16x128xf32> to vector<16x128xf32>
    %578 = arith.addf %539, %575 : vector<16x128xf32>
    %579 = arith.mulf %577, %578 : vector<16x128xf32>
    %c4_536 = arith.constant 4 : index
    %c6_537 = arith.constant 6 : index
    %c0_538 = arith.constant 0 : index
    %c0_539 = arith.constant 0 : index
    %580 = vector.load %arg3[%c4_536, %c6_537, %c0_538, %c0_539] : memref<8x8x16x128xf32, #tpu.memory_space<vmem>>, vector<1x1x16x128xf32>
    %581 = vector.shape_cast %580 : vector<1x1x16x128xf32> to vector<16x128xf32>
    %582 = arith.addf %543, %579 : vector<16x128xf32>
    %583 = arith.mulf %581, %582 : vector<16x128xf32>
    %c5_540 = arith.constant 5 : index
    %c6_541 = arith.constant 6 : index
    %c0_542 = arith.constant 0 : index
    %c0_543 = arith.constant 0 : index
    %584 = vector.load %arg3[%c5_540, %c6_541, %c0_542, %c0_543] : memref<8x8x16x128xf32, #tpu.memory_space<vmem>>, vector<1x1x16x128xf32>
    %585 = vector.shape_cast %584 : vector<1x1x16x128xf32> to vector<16x128xf32>
    %586 = arith.addf %547, %583 : vector<16x128xf32>
    %587 = arith.mulf %585, %586 : vector<16x128xf32>
    %c6_544 = arith.constant 6 : index
    %c6_545 = arith.constant 6 : index
    %c0_546 = arith.constant 0 : index
    %c0_547 = arith.constant 0 : index
    %588 = vector.load %arg3[%c6_544, %c6_545, %c0_546, %c0_547] : memref<8x8x16x128xf32, #tpu.memory_space<vmem>>, vector<1x1x16x128xf32>
    %589 = vector.shape_cast %588 : vector<1x1x16x128xf32> to vector<16x128xf32>
    %590 = arith.addf %551, %587 : vector<16x128xf32>
    %591 = arith.mulf %589, %590 : vector<16x128xf32>
    %c7_548 = arith.constant 7 : index
    %c6_549 = arith.constant 6 : index
    %c0_550 = arith.constant 0 : index
    %c0_551 = arith.constant 0 : index
    %592 = vector.load %arg3[%c7_548, %c6_549, %c0_550, %c0_551] : memref<8x8x16x128xf32, #tpu.memory_space<vmem>>, vector<1x1x16x128xf32>
    %593 = vector.shape_cast %592 : vector<1x1x16x128xf32> to vector<16x128xf32>
    %594 = arith.addf %555, %591 : vector<16x128xf32>
    %595 = arith.mulf %593, %594 : vector<16x128xf32>
    %596 = arith.addf %559, %562 : vector<16x128xf32>
    %597 = arith.addf %596, %595 : vector<16x128xf32>
    %598 = arith.mulf %80, %597 : vector<16x128xf32>
    %c0_552 = arith.constant 0 : index
    %c7_553 = arith.constant 7 : index
    %c0_554 = arith.constant 0 : index
    %c0_555 = arith.constant 0 : index
    %599 = vector.load %arg3[%c0_552, %c7_553, %c0_554, %c0_555] : memref<8x8x16x128xf32, #tpu.memory_space<vmem>>, vector<1x1x16x128xf32>
    %600 = vector.shape_cast %599 : vector<1x1x16x128xf32> to vector<16x128xf32>
    %601 = arith.addf %80, %567 : vector<16x128xf32>
    %602 = arith.addf %601, %80 : vector<16x128xf32>
    %603 = arith.mulf %600, %602 : vector<16x128xf32>
    %c1_556 = arith.constant 1 : index
    %c7_557 = arith.constant 7 : index
    %c0_558 = arith.constant 0 : index
    %c0_559 = arith.constant 0 : index
    %604 = vector.load %arg3[%c1_556, %c7_557, %c0_558, %c0_559] : memref<8x8x16x128xf32, #tpu.memory_space<vmem>>, vector<1x1x16x128xf32>
    %605 = vector.shape_cast %604 : vector<1x1x16x128xf32> to vector<16x128xf32>
    %606 = arith.addf %567, %603 : vector<16x128xf32>
    %607 = arith.mulf %605, %606 : vector<16x128xf32>
    %c2_560 = arith.constant 2 : index
    %c7_561 = arith.constant 7 : index
    %c0_562 = arith.constant 0 : index
    %c0_563 = arith.constant 0 : index
    %608 = vector.load %arg3[%c2_560, %c7_561, %c0_562, %c0_563] : memref<8x8x16x128xf32, #tpu.memory_space<vmem>>, vector<1x1x16x128xf32>
    %609 = vector.shape_cast %608 : vector<1x1x16x128xf32> to vector<16x128xf32>
    %610 = arith.addf %571, %607 : vector<16x128xf32>
    %611 = arith.mulf %609, %610 : vector<16x128xf32>
    %c3_564 = arith.constant 3 : index
    %c7_565 = arith.constant 7 : index
    %c0_566 = arith.constant 0 : index
    %c0_567 = arith.constant 0 : index
    %612 = vector.load %arg3[%c3_564, %c7_565, %c0_566, %c0_567] : memref<8x8x16x128xf32, #tpu.memory_space<vmem>>, vector<1x1x16x128xf32>
    %613 = vector.shape_cast %612 : vector<1x1x16x128xf32> to vector<16x128xf32>
    %614 = arith.addf %575, %611 : vector<16x128xf32>
    %615 = arith.mulf %613, %614 : vector<16x128xf32>
    %c4_568 = arith.constant 4 : index
    %c7_569 = arith.constant 7 : index
    %c0_570 = arith.constant 0 : index
    %c0_571 = arith.constant 0 : index
    %616 = vector.load %arg3[%c4_568, %c7_569, %c0_570, %c0_571] : memref<8x8x16x128xf32, #tpu.memory_space<vmem>>, vector<1x1x16x128xf32>
    %617 = vector.shape_cast %616 : vector<1x1x16x128xf32> to vector<16x128xf32>
    %618 = arith.addf %579, %615 : vector<16x128xf32>
    %619 = arith.mulf %617, %618 : vector<16x128xf32>
    %c5_572 = arith.constant 5 : index
    %c7_573 = arith.constant 7 : index
    %c0_574 = arith.constant 0 : index
    %c0_575 = arith.constant 0 : index
    %620 = vector.load %arg3[%c5_572, %c7_573, %c0_574, %c0_575] : memref<8x8x16x128xf32, #tpu.memory_space<vmem>>, vector<1x1x16x128xf32>
    %621 = vector.shape_cast %620 : vector<1x1x16x128xf32> to vector<16x128xf32>
    %622 = arith.addf %583, %619 : vector<16x128xf32>
    %623 = arith.mulf %621, %622 : vector<16x128xf32>
    %c6_576 = arith.constant 6 : index
    %c7_577 = arith.constant 7 : index
    %c0_578 = arith.constant 0 : index
    %c0_579 = arith.constant 0 : index
    %624 = vector.load %arg3[%c6_576, %c7_577, %c0_578, %c0_579] : memref<8x8x16x128xf32, #tpu.memory_space<vmem>>, vector<1x1x16x128xf32>
    %625 = vector.shape_cast %624 : vector<1x1x16x128xf32> to vector<16x128xf32>
    %626 = arith.addf %587, %623 : vector<16x128xf32>
    %627 = arith.mulf %625, %626 : vector<16x128xf32>
    %c7_580 = arith.constant 7 : index
    %c7_581 = arith.constant 7 : index
    %c0_582 = arith.constant 0 : index
    %c0_583 = arith.constant 0 : index
    %628 = vector.load %arg3[%c7_580, %c7_581, %c0_582, %c0_583] : memref<8x8x16x128xf32, #tpu.memory_space<vmem>>, vector<1x1x16x128xf32>
    %629 = vector.shape_cast %628 : vector<1x1x16x128xf32> to vector<16x128xf32>
    %630 = arith.addf %591, %627 : vector<16x128xf32>
    %631 = arith.mulf %629, %630 : vector<16x128xf32>
    %632 = arith.addf %595, %598 : vector<16x128xf32>
    %633 = arith.addf %632, %631 : vector<16x128xf32>
    %634 = arith.mulf %80, %633 : vector<16x128xf32>
    %635 = math.log %357 : vector<16x128xf32>
    %636 = math.log %634 : vector<16x128xf32>
    %637 = arith.addf %635, %636 : vector<16x128xf32>
    %cst_584 = arith.constant 5.000000e-02 : f32
    %638 = vector.broadcast %cst_584 : f32 to vector<16x128xf32>
    %639 = arith.mulf %638, %637 : vector<16x128xf32>
    %c0_585 = arith.constant 0 : index
    %c0_586 = arith.constant 0 : index
    %640 = vector.load %arg2[%c0_585, %c0_586] : memref<16x128xf32, #tpu.memory_space<vmem>>, vector<16x128xf32>
    tpu.vector_store %arg2[%c0_585, %c0_586], %639 {strides = array<i32>} : memref<16x128xf32, #tpu.memory_space<vmem>>, vector<16x128xf32>,
    return
  }
  func.func @transform_0(%arg0: i32) -> (i32, i32, i32, i32) {
    %c0_i32 = arith.constant 0 : i32
    %c0_i32_0 = arith.constant 0 : i32
    %c0_i32_1 = arith.constant 0 : i32
    %c0_i32_2 = arith.constant 0 : i32
    return %c0_i32, %c0_i32_0, %arg0, %c0_i32_1 : i32, i32, i32, i32
  }
  func.func @transform_1(%arg0: i32) -> (i32, i32) {
    %c0_i32 = arith.constant 0 : i32
    %c0_i32_0 = arith.constant 0 : i32
    return %arg0, %c0_i32 : i32, i32
  }
}

</mosaic_0001>

<llo_original>
// kernel: otam_matching.1
$region0: #{otam_matching.1}
  #allocation0 [shape = 'u32[]', space=smem, size = 0x4, offset = 0x4, fixed_abs, tag = 'smem constant byte address 0x4 - core index']
  #allocation1 [shape = 'u32[144,128]{1,0:T(1,128)}', space=vmem, size = 0x12000, scoped, tag = 'internal scratch']
  #allocation2 [shape = 'f32[8,8,16,128]{3,2,1,0:T(8,128)}', space=vmem, size = 0x80000, scoped, tag = 'scratch operand']
  %s0 = inlined_call_operand.vmem [shape: f32[8,8,16,128], index: 0, kind: input, shape index: {}]
  %s1 = inlined_call_operand.vmem [shape: f32[16,128], index: 1, kind: output, shape index: {}]
  %s2 = sld [smem:[#allocation0]]
  $region14: #{otam_matching.1} parent=0
    _
  %s4 = ssub.s32 1, %s2
  %s5 = scalar_select 0, %s4, %s2
  // Predicated region
  $region2: #{otam_matching.1} parent=0 // pred_check
    _
  $region3: #{otam_matching.1} parent=0 // pred_check_branch
    %7 = sbr.rel (0) target = $region5
  $region4: #{otam_matching.1} parent=0 // pred_region
    _
  $region5: #{otam_matching.1} parent=0 // pred_fallthru
    _
  %v8 = vld [vmem:[%s0] sm:$0xff]
  %v9 = vld [vmem:[%s0 + $0x8] sm:$0xff]
  %v10 = vld [vmem:[%s0 + $0x10] sm:$0xff]
  %v11 = vld [vmem:[%s0 + $0x18] sm:$0xff]
  %v12 = vld [vmem:[%s0 + $0x20] sm:$0xff]
  %v13 = vld [vmem:[%s0 + $0x28] sm:$0xff]
  %v14 = vld [vmem:[%s0 + $0x30] sm:$0xff]
  %v15 = vld [vmem:[%s0 + $0x38] sm:$0xff]
  %v16 = vld [vmem:[%s0 + $0x40] sm:$0xff]
  %v17 = vld [vmem:[%s0 + $0x48] sm:$0xff]
  %v18 = vld [vmem:[%s0 + $0x50] sm:$0xff]
  %v19 = vld [vmem:[%s0 + $0x58] sm:$0xff]
  %v20 = vld [vmem:[%s0 + $0x60] sm:$0xff]
  %v21 = vld [vmem:[%s0 + $0x68] sm:$0xff]
  %v22 = vld [vmem:[%s0 + $0x70] sm:$0xff]
  %v23 = vld [vmem:[%s0 + $0x78] sm:$0xff]
  %v24 = vsub.f32 %v8, 1.0
  %v25 = vsub.f32 %v9, 1.0
  %v26 = vsub.f32 %v10, 1.0
  %v27 = vsub.f32 %v11, 1.0
  %v28 = vsub.f32 %v12, 1.0
  %v29 = vsub.f32 %v13, 1.0
  %v30 = vsub.f32 %v14, 1.0
  %v31 = vsub.f32 %v15, 1.0
  %v32 = vsub.f32 %v16, 1.0
  %v33 = vsub.f32 %v17, 1.0
  %v34 = vsub.f32 %v18, 1.0
  %v35 = vsub.f32 %v19, 1.0
  %v36 = vsub.f32 %v20, 1.0
  %v37 = vsub.f32 %v21, 1.0
  %v38 = vsub.f32 %v22, 1.0
  %v39 = vsub.f32 %v23, 1.0
  %v40 = vmul.f32 %v24, 10.0
  %v41 = vmul.f32 %v25, 10.0
  %v42 = vmul.f32 %v26, 10.0
  %v43 = vmul.f32 %v27, 10.0
  %v44 = vmul.f32 %v28, 10.0
  %v45 = vmul.f32 %v29, 10.0
  %v46 = vmul.f32 %v30, 10.0
  %v47 = vmul.f32 %v31, 10.0
  %v48 = vmul.f32 %v32, 10.0
  %v49 = vmul.f32 %v33, 10.0
  %v50 = vmul.f32 %v34, 10.0
  %v51 = vmul.f32 %v35, 10.0
  %v52 = vmul.f32 %v36, 10.0
  %v53 = vmul.f32 %v37, 10.0
  %v54 = vmul.f32 %v38, 10.0
  %v55 = vmul.f32 %v39, 10.0
  %v56 = vmul.f32 %v40, 1.442695
  %v57 = vpow.pop %v56
  %v58 = vmul.f32 %v41, 1.442695
  %v59 = vpow.pop %v58
  %v60 = vmul.f32 %v42, 1.442695
  %v61 = vpow.pop %v60
  %v62 = vmul.f32 %v43, 1.442695
  %v63 = vpow.pop %v62
  %v64 = vmul.f32 %v44, 1.442695
  %v65 = vpow.pop %v64
  %v66 = vmul.f32 %v45, 1.442695
  %v67 = vpow.pop %v66
  %v68 = vmul.f32 %v46, 1.442695
  %v69 = vpow.pop %v68
  %v70 = vmul.f32 %v47, 1.442695
  %v71 = vpow.pop %v70
  %v72 = vmul.f32 %v48, 1.442695
  %v73 = vpow.pop %v72
  %v74 = vmul.f32 %v49, 1.442695
  %v75 = vpow.pop %v74
  %v76 = vmul.f32 %v50, 1.442695
  %v77 = vpow.pop %v76
  %v78 = vmul.f32 %v51, 1.442695
  %v79 = vpow.pop %v78
  %v80 = vmul.f32 %v52, 1.442695
  %v81 = vpow.pop %v80
  %v82 = vmul.f32 %v53, 1.442695
  %v83 = vpow.pop %v82
  %v84 = vmul.f32 %v54, 1.442695
  %v85 = vpow.pop %v84
  %v86 = vmul.f32 %v55, 1.442695
  %v87 = vpow.pop %v86
  %88 = vst [vmem:[#allocation2] sm:$0xff] %v57
  %89 = vst [vmem:[#allocation2 + $0x8] sm:$0xff] %v59
  %90 = vst [vmem:[#allocation2 + $0x10] sm:$0xff] %v61
  %91 = vst [vmem:[#allocation2 + $0x18] sm:$0xff] %v63
  %92 = vst [vmem:[#allocation2 + $0x20] sm:$0xff] %v65
  %93 = vst [vmem:[#allocation2 + $0x28] sm:$0xff] %v67
  %94 = vst [vmem:[#allocation2 + $0x30] sm:$0xff] %v69
  %95 = vst [vmem:[#allocation2 + $0x38] sm:$0xff] %v71
  %96 = vst [vmem:[#allocation2 + $0x40] sm:$0xff] %v73
  %97 = vst [vmem:[#allocation2 + $0x48] sm:$0xff] %v75
  %98 = vst [vmem:[#allocation2 + $0x50] sm:$0xff] %v77
  %99 = vst [vmem:[#allocation2 + $0x58] sm:$0xff] %v79
  %100 = vst [vmem:[#allocation2 + $0x60] sm:$0xff] %v81
  %101 = vst [vmem:[#allocation2 + $0x68] sm:$0xff] %v83
  %102 = vst [vmem:[#allocation2 + $0x70] sm:$0xff] %v85
  %103 = vst [vmem:[#allocation2 + $0x78] sm:$0xff] %v87
  %s104 = scalar_lea.vmem %s0, 128
  %v105 = vld [vmem:[%s104] sm:$0xff]
  %v106 = vld [vmem:[%s104 + $0x8] sm:$0xff]
  %v107 = vld [vmem:[%s104 + $0x10] sm:$0xff]
  %v108 = vld [vmem:[%s104 + $0x18] sm:$0xff]
  %v109 = vld [vmem:[%s104 + $0x20] sm:$0xff]
  %v110 = vld [vmem:[%s104 + $0x28] sm:$0xff]
  %v111 = vld [vmem:[%s104 + $0x30] sm:$0xff]
  %v112 = vld [vmem:[%s104 + $0x38] sm:$0xff]
  %v113 = vld [vmem:[%s104 + $0x40] sm:$0xff]
  %v114 = vld [vmem:[%s104 + $0x48] sm:$0xff]
  %v115 = vld [vmem:[%s104 + $0x50] sm:$0xff]
  %v116 = vld [vmem:[%s104 + $0x58] sm:$0xff]
  %v117 = vld [vmem:[%s104 + $0x60] sm:$0xff]
  %v118 = vld [vmem:[%s104 + $0x68] sm:$0xff]
  %v119 = vld [vmem:[%s104 + $0x70] sm:$0xff]
  %v120 = vld [vmem:[%s104 + $0x78] sm:$0xff]
  %v121 = vsub.f32 %v105, 1.0
  %v122 = vsub.f32 %v106, 1.0
  %v123 = vsub.f32 %v107, 1.0
  %v124 = vsub.f32 %v108, 1.0
  %v125 = vsub.f32 %v109, 1.0
  %v126 = vsub.f32 %v110, 1.0
  %v127 = vsub.f32 %v111, 1.0
  %v128 = vsub.f32 %v112, 1.0
  %v129 = vsub.f32 %v113, 1.0
  %v130 = vsub.f32 %v114, 1.0
  %v131 = vsub.f32 %v115, 1.0
  %v132 = vsub.f32 %v116, 1.0
  %v133 = vsub.f32 %v117, 1.0
  %v134 = vsub.f32 %v118, 1.0
  %v135 = vsub.f32 %v119, 1.0
  %v136 = vsub.f32 %v120, 1.0
  %v137 = vmul.f32 %v121, 10.0
  %v138 = vmul.f32 %v122, 10.0
  %v139 = vmul.f32 %v123, 10.0
  %v140 = vmul.f32 %v124, 10.0
  %v141 = vmul.f32 %v125, 10.0
  %v142 = vmul.f32 %v126, 10.0
  %v143 = vmul.f32 %v127, 10.0
  %v144 = vmul.f32 %v128, 10.0
  %v145 = vmul.f32 %v129, 10.0
  %v146 = vmul.f32 %v130, 10.0
  %v147 = vmul.f32 %v131, 10.0
  %v148 = vmul.f32 %v132, 10.0
  %v149 = vmul.f32 %v133, 10.0
  %v150 = vmul.f32 %v134, 10.0
  %v151 = vmul.f32 %v135, 10.0
  %v152 = vmul.f32 %v136, 10.0
  %v153 = vmul.f32 %v137, 1.442695
  %v154 = vpow.pop %v153
  %v155 = vmul.f32 %v138, 1.442695
  %v156 = vpow.pop %v155
  %v157 = vmul.f32 %v139, 1.442695
  %v158 = vpow.pop %v157
  %v159 = vmul.f32 %v140, 1.442695
  %v160 = vpow.pop %v159
  %v161 = vmul.f32 %v141, 1.442695
  %v162 = vpow.pop %v161
  %v163 = vmul.f32 %v142, 1.442695
  %v164 = vpow.pop %v163
  %v165 = vmul.f32 %v143, 1.442695
  %v166 = vpow.pop %v165
  %v167 = vmul.f32 %v144, 1.442695
  %v168 = vpow.pop %v167
  %v169 = vmul.f32 %v145, 1.442695
  %v170 = vpow.pop %v169
  %v171 = vmul.f32 %v146, 1.442695
  %v172 = vpow.pop %v171
  %v173 = vmul.f32 %v147, 1.442695
  %v174 = vpow.pop %v173
  %v175 = vmul.f32 %v148, 1.442695
  %v176 = vpow.pop %v175
  %v177 = vmul.f32 %v149, 1.442695
  %v178 = vpow.pop %v177
  %v179 = vmul.f32 %v150, 1.442695
  %v180 = vpow.pop %v179
  %v181 = vmul.f32 %v151, 1.442695
  %v182 = vpow.pop %v181
  %v183 = vmul.f32 %v152, 1.442695
  %v184 = vpow.pop %v183
  %s185 = scalar_lea.vmem [#allocation2], 128
  %186 = vst [vmem:[%s185] sm:$0xff] %v154
  %187 = vst [vmem:[%s185 + $0x8] sm:$0xff] %v156
  %188 = vst [vmem:[%s185 + $0x10] sm:$0xff] %v158
  %189 = vst [vmem:[%s185 + $0x18] sm:$0xff] %v160
  %190 = vst [vmem:[%s185 + $0x20] sm:$0xff] %v162
  %191 = vst [vmem:[%s185 + $0x28] sm:$0xff] %v164
  %192 = vst [vmem:[%s185 + $0x30] sm:$0xff] %v166
  %193 = vst [vmem:[%s185 + $0x38] sm:$0xff] %v168
  %194 = vst [vmem:[%s185 + $0x40] sm:$0xff] %v170
  %195 = vst [vmem:[%s185 + $0x48] sm:$0xff] %v172
  %196 = vst [vmem:[%s185 + $0x50] sm:$0xff] %v174
  %197 = vst [vmem:[%s185 + $0x58] sm:$0xff] %v176
  %198 = vst [vmem:[%s185 + $0x60] sm:$0xff] %v178
  %199 = vst [vmem:[%s185 + $0x68] sm:$0xff] %v180
  %200 = vst [vmem:[%s185 + $0x70] sm:$0xff] %v182
  %201 = vst [vmem:[%s185 + $0x78] sm:$0xff] %v184
  %s202 = scalar_lea.vmem %s0, 256
  %v203 = vld [vmem:[%s202] sm:$0xff]
  %v204 = vld [vmem:[%s202 + $0x8] sm:$0xff]
  %v205 = vld [vmem:[%s202 + $0x10] sm:$0xff]
  %v206 = vld [vmem:[%s202 + $0x18] sm:$0xff]
  %v207 = vld [vmem:[%s202 + $0x20] sm:$0xff]
  %v208 = vld [vmem:[%s202 + $0x28] sm:$0xff]
  %v209 = vld [vmem:[%s202 + $0x30] sm:$0xff]
  %v210 = vld [vmem:[%s202 + $0x38] sm:$0xff]
  %v211 = vld [vmem:[%s202 + $0x40] sm:$0xff]
  %v212 = vld [vmem:[%s202 + $0x48] sm:$0xff]
  %v213 = vld [vmem:[%s202 + $0x50] sm:$0xff]
  %v214 = vld [vmem:[%s202 + $0x58] sm:$0xff]
  %v215 = vld [vmem:[%s202 + $0x60] sm:$0xff]
  %v216 = vld [vmem:[%s202 + $0x68] sm:$0xff]
  %v217 = vld [vmem:[%s202 + $0x70] sm:$0xff]
  %v218 = vld [vmem:[%s202 + $0x78] sm:$0xff]
  %v219 = vsub.f32 %v203, 1.0
  %v220 = vsub.f32 %v204, 1.0
  %v221 = vsub.f32 %v205, 1.0
  %v222 = vsub.f32 %v206, 1.0
  %v223 = vsub.f32 %v207, 1.0
  %v224 = vsub.f32 %v208, 1.0
  %v225 = vsub.f32 %v209, 1.0
  %v226 = vsub.f32 %v210, 1.0
  %v227 = vsub.f32 %v211, 1.0
  %v228 = vsub.f32 %v212, 1.0
  %v229 = vsub.f32 %v213, 1.0
  %v230 = vsub.f32 %v214, 1.0
  %v231 = vsub.f32 %v215, 1.0
  %v232 = vsub.f32 %v216, 1.0
  %v233 = vsub.f32 %v217, 1.0
  %v234 = vsub.f32 %v218, 1.0
  %v235 = vmul.f32 %v219, 10.0
  %v236 = vmul.f32 %v220, 10.0
  %v237 = vmul.f32 %v221, 10.0
  %v238 = vmul.f32 %v222, 10.0
  %v239 = vmul.f32 %v223, 10.0
  %v240 = vmul.f32 %v224, 10.0
  %v241 = vmul.f32 %v225, 10.0
  %v242 = vmul.f32 %v226, 10.0
  %v243 = vmul.f32 %v227, 10.0
  %v244 = vmul.f32 %v228, 10.0
  %v245 = vmul.f32 %v229, 10.0
  %v246 = vmul.f32 %v230, 10.0
  %v247 = vmul.f32 %v231, 10.0
  %v248 = vmul.f32 %v232, 10.0
  %v249 = vmul.f32 %v233, 10.0
  %v250 = vmul.f32 %v234, 10.0
  %v251 = vmul.f32 %v235, 1.442695
  %v252 = vpow.pop %v251
  %v253 = vmul.f32 %v236, 1.442695
  %v254 = vpow.pop %v253
  %v255 = vmul.f32 %v237, 1.442695
  %v256 = vpow.pop %v255
  %v257 = vmul.f32 %v238, 1.442695
  %v258 = vpow.pop %v257
  %v259 = vmul.f32 %v239, 1.442695
  %v260 = vpow.pop %v259
  %v261 = vmul.f32 %v240, 1.442695
  %v262 = vpow.pop %v261
  %v263 = vmul.f32 %v241, 1.442695
  %v264 = vpow.pop %v263
  %v265 = vmul.f32 %v242, 1.442695
  %v266 = vpow.pop %v265
  %v267 = vmul.f32 %v243, 1.442695
  %v268 = vpow.pop %v267
  %v269 = vmul.f32 %v244, 1.442695
  %v270 = vpow.pop %v269
  %v271 = vmul.f32 %v245, 1.442695
  %v272 = vpow.pop %v271
  %v273 = vmul.f32 %v246, 1.442695
  %v274 = vpow.pop %v273
  %v275 = vmul.f32 %v247, 1.442695
  %v276 = vpow.pop %v275
  %v277 = vmul.f32 %v248, 1.442695
  %v278 = vpow.pop %v277
  %v279 = vmul.f32 %v249, 1.442695
  %v280 = vpow.pop %v279
  %v281 = vmul.f32 %v250, 1.442695
  %v282 = vpow.pop %v281
  %s283 = scalar_lea.vmem [#allocation2], 256
  %284 = vst [vmem:[%s283] sm:$0xff] %v252
  %285 = vst [vmem:[%s283 + $0x8] sm:$0xff] %v254
  %286 = vst [vmem:[%s283 + $0x10] sm:$0xff] %v256
  %287 = vst [vmem:[%s283 + $0x18] sm:$0xff] %v258
  %288 = vst [vmem:[%s283 + $0x20] sm:$0xff] %v260
  %289 = vst [vmem:[%s283 + $0x28] sm:$0xff] %v262
  %290 = vst [vmem:[%s283 + $0x30] sm:$0xff] %v264
  %291 = vst [vmem:[%s283 + $0x38] sm:$0xff] %v266
  %292 = vst [vmem:[%s283 + $0x40] sm:$0xff] %v268
  %293 = vst [vmem:[%s283 + $0x48] sm:$0xff] %v270
  %294 = vst [vmem:[%s283 + $0x50] sm:$0xff] %v272
  %295 = vst [vmem:[%s283 + $0x58] sm:$0xff] %v274
  %296 = vst [vmem:[%s283 + $0x60] sm:$0xff] %v276
  %297 = vst [vmem:[%s283 + $0x68] sm:$0xff] %v278
  %298 = vst [vmem:[%s283 + $0x70] sm:$0xff] %v280
  %299 = vst [vmem:[%s283 + $0x78] sm:$0xff] %v282
  %s300 = scalar_lea.vmem %s0, 384
  %v301 = vld [vmem:[%s300] sm:$0xff]
  %v302 = vld [vmem:[%s300 + $0x8] sm:$0xff]
  %v303 = vld [vmem:[%s300 + $0x10] sm:$0xff]
  %v304 = vld [vmem:[%s300 + $0x18] sm:$0xff]
  %v305 = vld [vmem:[%s300 + $0x20] sm:$0xff]
  %v306 = vld [vmem:[%s300 + $0x28] sm:$0xff]
  %v307 = vld [vmem:[%s300 + $0x30] sm:$0xff]
  %v308 = vld [vmem:[%s300 + $0x38] sm:$0xff]
  %v309 = vld [vmem:[%s300 + $0x40] sm:$0xff]
  %v310 = vld [vmem:[%s300 + $0x48] sm:$0xff]
  %v311 = vld [vmem:[%s300 + $0x50] sm:$0xff]
  %v312 = vld [vmem:[%s300 + $0x58] sm:$0xff]
  %v313 = vld [vmem:[%s300 + $0x60] sm:$0xff]
  %v314 = vld [vmem:[%s300 + $0x68] sm:$0xff]
  %v315 = vld [vmem:[%s300 + $0x70] sm:$0xff]
  %v316 = vld [vmem:[%s300 + $0x78] sm:$0xff]
  %v317 = vsub.f32 %v301, 1.0
  %v318 = vsub.f32 %v302, 1.0
  %v319 = vsub.f32 %v303, 1.0
  %v320 = vsub.f32 %v304, 1.0
  %v321 = vsub.f32 %v305, 1.0
  %v322 = vsub.f32 %v306, 1.0
  %v323 = vsub.f32 %v307, 1.0
  %v324 = vsub.f32 %v308, 1.0
  %v325 = vsub.f32 %v309, 1.0
  %v326 = vsub.f32 %v310, 1.0
  %v327 = vsub.f32 %v311, 1.0
  %v328 = vsub.f32 %v312, 1.0
  %v329 = vsub.f32 %v313, 1.0
  %v330 = vsub.f32 %v314, 1.0
  %v331 = vsub.f32 %v315, 1.0
  %v332 = vsub.f32 %v316, 1.0
  %v333 = vmul.f32 %v317, 10.0
  %v334 = vmul.f32 %v318, 10.0
  %v335 = vmul.f32 %v319, 10.0
  %v336 = vmul.f32 %v320, 10.0
  %v337 = vmul.f32 %v321, 10.0
  %v338 = vmul.f32 %v322, 10.0
  %v339 = vmul.f32 %v323, 10.0
  %v340 = vmul.f32 %v324, 10.0
  %v341 = vmul.f32 %v325, 10.0
  %v342 = vmul.f32 %v326, 10.0
  %v343 = vmul.f32 %v327, 10.0
  %v344 = vmul.f32 %v328, 10.0
  %v345 = vmul.f32 %v329, 10.0
  %v346 = vmul.f32 %v330, 10.0
  %v347 = vmul.f32 %v331, 10.0
  %v348 = vmul.f32 %v332, 10.0
  %v349 = vmul.f32 %v333, 1.442695
  %v350 = vpow.pop %v349
  %v351 = vmul.f32 %v334, 1.442695
  %v352 = vpow.pop %v351
  %v353 = vmul.f32 %v335, 1.442695
  %v354 = vpow.pop %v353
  %v355 = vmul.f32 %v336, 1.442695
  %v356 = vpow.pop %v355
  %v357 = vmul.f32 %v337, 1.442695
  %v358 = vpow.pop %v357
  %v359 = vmul.f32 %v338, 1.442695
  %v360 = vpow.pop %v359
  %v361 = vmul.f32 %v339, 1.442695
  %v362 = vpow.pop %v361
  %v363 = vmul.f32 %v340, 1.442695
  %v364 = vpow.pop %v363
  %v365 = vmul.f32 %v341, 1.442695
  %v366 = vpow.pop %v365
  %v367 = vmul.f32 %v342, 1.442695
  %v368 = vpow.pop %v367
  %v369 = vmul.f32 %v343, 1.442695
  %v370 = vpow.pop %v369
  %v371 = vmul.f32 %v344, 1.442695
  %v372 = vpow.pop %v371
  %v373 = vmul.f32 %v345, 1.442695
  %v374 = vpow.pop %v373
  %v375 = vmul.f32 %v346, 1.442695
  %v376 = vpow.pop %v375
  %v377 = vmul.f32 %v347, 1.442695
  %v378 = vpow.pop %v377
  %v379 = vmul.f32 %v348, 1.442695
  %v380 = vpow.pop %v379
  %s381 = scalar_lea.vmem [#allocation2], 384
  %382 = vst [vmem:[%s381] sm:$0xff] %v350
  %383 = vst [vmem:[%s381 + $0x8] sm:$0xff] %v352
  %384 = vst [vmem:[%s381 + $0x10] sm:$0xff] %v354
  %385 = vst [vmem:[%s381 + $0x18] sm:$0xff] %v356
  %386 = vst [vmem:[%s381 + $0x20] sm:$0xff] %v358
  %387 = vst [vmem:[%s381 + $0x28] sm:$0xff] %v360
  %388 = vst [vmem:[%s381 + $0x30] sm:$0xff] %v362
  %389 = vst [vmem:[%s381 + $0x38] sm:$0xff] %v364
  %390 = vst [vmem:[%s381 + $0x40] sm:$0xff] %v366
  %391 = vst [vmem:[%s381 + $0x48] sm:$0xff] %v368
  %392 = vst [vmem:[%s381 + $0x50] sm:$0xff] %v370
  %393 = vst [vmem:[%s381 + $0x58] sm:$0xff] %v372
  %394 = vst [vmem:[%s381 + $0x60] sm:$0xff] %v374
  %395 = vst [vmem:[%s381 + $0x68] sm:$0xff] %v376
  %396 = vst [vmem:[%s381 + $0x70] sm:$0xff] %v378
  %397 = vst [vmem:[%s381 + $0x78] sm:$0xff] %v380
  %s398 = scalar_lea.vmem %s0, 512
  %v399 = vld [vmem:[%s398] sm:$0xff]
  %v400 = vld [vmem:[%s398 + $0x8] sm:$0xff]
  %v401 = vld [vmem:[%s398 + $0x10] sm:$0xff]
  %v402 = vld [vmem:[%s398 + $0x18] sm:$0xff]
  %v403 = vld [vmem:[%s398 + $0x20] sm:$0xff]
  %v404 = vld [vmem:[%s398 + $0x28] sm:$0xff]
  %v405 = vld [vmem:[%s398 + $0x30] sm:$0xff]
  %v406 = vld [vmem:[%s398 + $0x38] sm:$0xff]
  %v407 = vld [vmem:[%s398 + $0x40] sm:$0xff]
  %v408 = vld [vmem:[%s398 + $0x48] sm:$0xff]
  %v409 = vld [vmem:[%s398 + $0x50] sm:$0xff]
  %v410 = vld [vmem:[%s398 + $0x58] sm:$0xff]
  %v411 = vld [vmem:[%s398 + $0x60] sm:$0xff]
  %v412 = vld [vmem:[%s398 + $0x68] sm:$0xff]
  %v413 = vld [vmem:[%s398 + $0x70] sm:$0xff]
  %v414 = vld [vmem:[%s398 + $0x78] sm:$0xff]
  %v415 = vsub.f32 %v399, 1.0
  %v416 = vsub.f32 %v400, 1.0
  %v417 = vsub.f32 %v401, 1.0
  %v418 = vsub.f32 %v402, 1.0
  %v419 = vsub.f32 %v403, 1.0
  %v420 = vsub.f32 %v404, 1.0
  %v421 = vsub.f32 %v405, 1.0
  %v422 = vsub.f32 %v406, 1.0
  %v423 = vsub.f32 %v407, 1.0
  %v424 = vsub.f32 %v408, 1.0
  %v425 = vsub.f32 %v409, 1.0
  %v426 = vsub.f32 %v410, 1.0
  %v427 = vsub.f32 %v411, 1.0
  %v428 = vsub.f32 %v412, 1.0
  %v429 = vsub.f32 %v413, 1.0
  %v430 = vsub.f32 %v414, 1.0
  %v431 = vmul.f32 %v415, 10.0
  %v432 = vmul.f32 %v416, 10.0
  %v433 = vmul.f32 %v417, 10.0
  %v434 = vmul.f32 %v418, 10.0
  %v435 = vmul.f32 %v419, 10.0
  %v436 = vmul.f32 %v420, 10.0
  %v437 = vmul.f32 %v421, 10.0
  %v438 = vmul.f32 %v422, 10.0
  %v439 = vmul.f32 %v423, 10.0
  %v440 = vmul.f32 %v424, 10.0
  %v441 = vmul.f32 %v425, 10.0
  %v442 = vmul.f32 %v426, 10.0
  %v443 = vmul.f32 %v427, 10.0
  %v444 = vmul.f32 %v428, 10.0
  %v445 = vmul.f32 %v429, 10.0
  %v446 = vmul.f32 %v430, 10.0
  %v447 = vmul.f32 %v431, 1.442695
  %v448 = vpow.pop %v447
  %v449 = vmul.f32 %v432, 1.442695
  %v450 = vpow.pop %v449
  %v451 = vmul.f32 %v433, 1.442695
  %v452 = vpow.pop %v451
  %v453 = vmul.f32 %v434, 1.442695
  %v454 = vpow.pop %v453
  %v455 = vmul.f32 %v435, 1.442695
  %v456 = vpow.pop %v455
  %v457 = vmul.f32 %v436, 1.442695
  %v458 = vpow.pop %v457
  %v459 = vmul.f32 %v437, 1.442695
  %v460 = vpow.pop %v459
  %v461 = vmul.f32 %v438, 1.442695
  %v462 = vpow.pop %v461
  %v463 = vmul.f32 %v439, 1.442695
  %v464 = vpow.pop %v463
  %v465 = vmul.f32 %v440, 1.442695
  %v466 = vpow.pop %v465
  %v467 = vmul.f32 %v441, 1.442695
  %v468 = vpow.pop %v467
  %v469 = vmul.f32 %v442, 1.442695
  %v470 = vpow.pop %v469
  %v471 = vmul.f32 %v443, 1.442695
  %v472 = vpow.pop %v471
  %v473 = vmul.f32 %v444, 1.442695
  %v474 = vpow.pop %v473
  %v475 = vmul.f32 %v445, 1.442695
  %v476 = vpow.pop %v475
  %v477 = vmul.f32 %v446, 1.442695
  %v478 = vpow.pop %v477
  %s479 = scalar_lea.vmem [#allocation2], 512
  %480 = vst [vmem:[%s479] sm:$0xff] %v448
  %481 = vst [vmem:[%s479 + $0x8] sm:$0xff] %v450
  %482 = vst [vmem:[%s479 + $0x10] sm:$0xff] %v452
  %483 = vst [vmem:[%s479 + $0x18] sm:$0xff] %v454
  %484 = vst [vmem:[%s479 + $0x20] sm:$0xff] %v456
  %485 = vst [vmem:[%s479 + $0x28] sm:$0xff] %v458
  %486 = vst [vmem:[%s479 + $0x30] sm:$0xff] %v460
  %487 = vst [vmem:[%s479 + $0x38] sm:$0xff] %v462
  %488 = vst [vmem:[%s479 + $0x40] sm:$0xff] %v464
  %489 = vst [vmem:[%s479 + $0x48] sm:$0xff] %v466
  %490 = vst [vmem:[%s479 + $0x50] sm:$0xff] %v468
  %491 = vst [vmem:[%s479 + $0x58] sm:$0xff] %v470
  %492 = vst [vmem:[%s479 + $0x60] sm:$0xff] %v472
  %493 = vst [vmem:[%s479 + $0x68] sm:$0xff] %v474
  %494 = vst [vmem:[%s479 + $0x70] sm:$0xff] %v476
  %495 = vst [vmem:[%s479 + $0x78] sm:$0xff] %v478
  %s496 = scalar_lea.vmem %s0, 640
  %v497 = vld [vmem:[%s496] sm:$0xff]
  %v498 = vld [vmem:[%s496 + $0x8] sm:$0xff]
  %v499 = vld [vmem:[%s496 + $0x10] sm:$0xff]
  %v500 = vld [vmem:[%s496 + $0x18] sm:$0xff]
  %v501 = vld [vmem:[%s496 + $0x20] sm:$0xff]
  %v502 = vld [vmem:[%s496 + $0x28] sm:$0xff]
  %v503 = vld [vmem:[%s496 + $0x30] sm:$0xff]
  %v504 = vld [vmem:[%s496 + $0x38] sm:$0xff]
  %v505 = vld [vmem:[%s496 + $0x40] sm:$0xff]
  %v506 = vld [vmem:[%s496 + $0x48] sm:$0xff]
  %v507 = vld [vmem:[%s496 + $0x50] sm:$0xff]
  %v508 = vld [vmem:[%s496 + $0x58] sm:$0xff]
  %v509 = vld [vmem:[%s496 + $0x60] sm:$0xff]
  %v510 = vld [vmem:[%s496 + $0x68] sm:$0xff]
  %v511 = vld [vmem:[%s496 + $0x70] sm:$0xff]
  %v512 = vld [vmem:[%s496 + $0x78] sm:$0xff]
  %v513 = vsub.f32 %v497, 1.0
  %v514 = vsub.f32 %v498, 1.0
  %v515 = vsub.f32 %v499, 1.0
  %v516 = vsub.f32 %v500, 1.0
  %v517 = vsub.f32 %v501, 1.0
  %v518 = vsub.f32 %v502, 1.0
  %v519 = vsub.f32 %v503, 1.0
  %v520 = vsub.f32 %v504, 1.0
  %v521 = vsub.f32 %v505, 1.0
  %v522 = vsub.f32 %v506, 1.0
  %v523 = vsub.f32 %v507, 1.0
  %v524 = vsub.f32 %v508, 1.0
  %v525 = vsub.f32 %v509, 1.0
  %v526 = vsub.f32 %v510, 1.0
  %v527 = vsub.f32 %v511, 1.0
  %v528 = vsub.f32 %v512, 1.0
  %v529 = vmul.f32 %v513, 10.0
  %v530 = vmul.f32 %v514, 10.0
  %v531 = vmul.f32 %v515, 10.0
  %v532 = vmul.f32 %v516, 10.0
  %v533 = vmul.f32 %v517, 10.0
  %v534 = vmul.f32 %v518, 10.0
  %v535 = vmul.f32 %v519, 10.0
  %v536 = vmul.f32 %v520, 10.0
  %v537 = vmul.f32 %v521, 10.0
  %v538 = vmul.f32 %v522, 10.0
  %v539 = vmul.f32 %v523, 10.0
  %v540 = vmul.f32 %v524, 10.0
  %v541 = vmul.f32 %v525, 10.0
  %v542 = vmul.f32 %v526, 10.0
  %v543 = vmul.f32 %v527, 10.0
  %v544 = vmul.f32 %v528, 10.0
  %v545 = vmul.f32 %v529, 1.442695
  %v546 = vpow.pop %v545
  %v547 = vmul.f32 %v530, 1.442695
  %v548 = vpow.pop %v547
  %v549 = vmul.f32 %v531, 1.442695
  %v550 = vpow.pop %v549
  %v551 = vmul.f32 %v532, 1.442695
  %v552 = vpow.pop %v551
  %v553 = vmul.f32 %v533, 1.442695
  %v554 = vpow.pop %v553
  %v555 = vmul.f32 %v534, 1.442695
  %v556 = vpow.pop %v555
  %v557 = vmul.f32 %v535, 1.442695
  %v558 = vpow.pop %v557
  %v559 = vmul.f32 %v536, 1.442695
  %v560 = vpow.pop %v559
  %v561 = vmul.f32 %v537, 1.442695
  %v562 = vpow.pop %v561
  %v563 = vmul.f32 %v538, 1.442695
  %v564 = vpow.pop %v563
  %v565 = vmul.f32 %v539, 1.442695
  %v566 = vpow.pop %v565
  %v567 = vmul.f32 %v540, 1.442695
  %v568 = vpow.pop %v567
  %v569 = vmul.f32 %v541, 1.442695
  %v570 = vpow.pop %v569
  %v571 = vmul.f32 %v542, 1.442695
  %v572 = vpow.pop %v571
  %v573 = vmul.f32 %v543, 1.442695
  %v574 = vpow.pop %v573
  %v575 = vmul.f32 %v544, 1.442695
  %v576 = vpow.pop %v575
  %s577 = scalar_lea.vmem [#allocation2], 640
  %578 = vst [vmem:[%s577] sm:$0xff] %v546
  %579 = vst [vmem:[%s577 + $0x8] sm:$0xff] %v548
  %580 = vst [vmem:[%s577 + $0x10] sm:$0xff] %v550
  %581 = vst [vmem:[%s577 + $0x18] sm:$0xff] %v552
  %582 = vst [vmem:[%s577 + $0x20] sm:$0xff] %v554
  %583 = vst [vmem:[%s577 + $0x28] sm:$0xff] %v556
  %584 = vst [vmem:[%s577 + $0x30] sm:$0xff] %v558
  %585 = vst [vmem:[%s577 + $0x38] sm:$0xff] %v560
  %586 = vst [vmem:[%s577 + $0x40] sm:$0xff] %v562
  %587 = vst [vmem:[%s577 + $0x48] sm:$0xff] %v564
  %588 = vst [vmem:[%s577 + $0x50] sm:$0xff] %v566
  %589 = vst [vmem:[%s577 + $0x58] sm:$0xff] %v568
  %590 = vst [vmem:[%s577 + $0x60] sm:$0xff] %v570
  %591 = vst [vmem:[%s577 + $0x68] sm:$0xff] %v572
  %592 = vst [vmem:[%s577 + $0x70] sm:$0xff] %v574
  %593 = vst [vmem:[%s577 + $0x78] sm:$0xff] %v576
  %s594 = scalar_lea.vmem %s0, 768
  %v595 = vld [vmem:[%s594] sm:$0xff]
  %v596 = vld [vmem:[%s594 + $0x8] sm:$0xff]
  %v597 = vld [vmem:[%s594 + $0x10] sm:$0xff]
  %v598 = vld [vmem:[%s594 + $0x18] sm:$0xff]
  %v599 = vld [vmem:[%s594 + $0x20] sm:$0xff]
  %v600 = vld [vmem:[%s594 + $0x28] sm:$0xff]
  %v601 = vld [vmem:[%s594 + $0x30] sm:$0xff]
  %v602 = vld [vmem:[%s594 + $0x38] sm:$0xff]
  %v603 = vld [vmem:[%s594 + $0x40] sm:$0xff]
  %v604 = vld [vmem:[%s594 + $0x48] sm:$0xff]
  %v605 = vld [vmem:[%s594 + $0x50] sm:$0xff]
  %v606 = vld [vmem:[%s594 + $0x58] sm:$0xff]
  %v607 = vld [vmem:[%s594 + $0x60] sm:$0xff]
  %v608 = vld [vmem:[%s594 + $0x68] sm:$0xff]
  %v609 = vld [vmem:[%s594 + $0x70] sm:$0xff]
  %v610 = vld [vmem:[%s594 + $0x78] sm:$0xff]
  %v611 = vsub.f32 %v595, 1.0
  %v612 = vsub.f32 %v596, 1.0
  %v613 = vsub.f32 %v597, 1.0
  %v614 = vsub.f32 %v598, 1.0
  %v615 = vsub.f32 %v599, 1.0
  %v616 = vsub.f32 %v600, 1.0
  %v617 = vsub.f32 %v601, 1.0
  %v618 = vsub.f32 %v602, 1.0
  %v619 = vsub.f32 %v603, 1.0
  %v620 = vsub.f32 %v604, 1.0
  %v621 = vsub.f32 %v605, 1.0
  %v622 = vsub.f32 %v606, 1.0
  %v623 = vsub.f32 %v607, 1.0
  %v624 = vsub.f32 %v608, 1.0
  %v625 = vsub.f32 %v609, 1.0
  %v626 = vsub.f32 %v610, 1.0
  %v627 = vmul.f32 %v611, 10.0
  %v628 = vmul.f32 %v612, 10.0
  %v629 = vmul.f32 %v613, 10.0
  %v630 = vmul.f32 %v614, 10.0
  %v631 = vmul.f32 %v615, 10.0
  %v632 = vmul.f32 %v616, 10.0
  %v633 = vmul.f32 %v617, 10.0
  %v634 = vmul.f32 %v618, 10.0
  %v635 = vmul.f32 %v619, 10.0
  %v636 = vmul.f32 %v620, 10.0
  %v637 = vmul.f32 %v621, 10.0
  %v638 = vmul.f32 %v622, 10.0
  %v639 = vmul.f32 %v623, 10.0
  %v640 = vmul.f32 %v624, 10.0
  %v641 = vmul.f32 %v625, 10.0
  %v642 = vmul.f32 %v626, 10.0
  %v643 = vmul.f32 %v627, 1.442695
  %v644 = vpow.pop %v643
  %v645 = vmul.f32 %v628, 1.442695
  %v646 = vpow.pop %v645
  %v647 = vmul.f32 %v629, 1.442695
  %v648 = vpow.pop %v647
  %v649 = vmul.f32 %v630, 1.442695
  %v650 = vpow.pop %v649
  %v651 = vmul.f32 %v631, 1.442695
  %v652 = vpow.pop %v651
  %v653 = vmul.f32 %v632, 1.442695
  %v654 = vpow.pop %v653
  %v655 = vmul.f32 %v633, 1.442695
  %v656 = vpow.pop %v655
  %v657 = vmul.f32 %v634, 1.442695
  %v658 = vpow.pop %v657
  %v659 = vmul.f32 %v635, 1.442695
  %v660 = vpow.pop %v659
  %v661 = vmul.f32 %v636, 1.442695
  %v662 = vpow.pop %v661
  %v663 = vmul.f32 %v637, 1.442695
  %v664 = vpow.pop %v663
  %v665 = vmul.f32 %v638, 1.442695
  %v666 = vpow.pop %v665
  %v667 = vmul.f32 %v639, 1.442695
  %v668 = vpow.pop %v667
  %v669 = vmul.f32 %v640, 1.442695
  %v670 = vpow.pop %v669
  %v671 = vmul.f32 %v641, 1.442695
  %v672 = vpow.pop %v671
  %v673 = vmul.f32 %v642, 1.442695
  %v674 = vpow.pop %v673
  %s675 = scalar_lea.vmem [#allocation2], 768
  %676 = vst [vmem:[%s675] sm:$0xff] %v644
  %677 = vst [vmem:[%s675 + $0x8] sm:$0xff] %v646
  %678 = vst [vmem:[%s675 + $0x10] sm:$0xff] %v648
  %679 = vst [vmem:[%s675 + $0x18] sm:$0xff] %v650
  %680 = vst [vmem:[%s675 + $0x20] sm:$0xff] %v652
  %681 = vst [vmem:[%s675 + $0x28] sm:$0xff] %v654
  %682 = vst [vmem:[%s675 + $0x30] sm:$0xff] %v656
  %683 = vst [vmem:[%s675 + $0x38] sm:$0xff] %v658
  %684 = vst [vmem:[%s675 + $0x40] sm:$0xff] %v660
  %685 = vst [vmem:[%s675 + $0x48] sm:$0xff] %v662
  %686 = vst [vmem:[%s675 + $0x50] sm:$0xff] %v664
  %687 = vst [vmem:[%s675 + $0x58] sm:$0xff] %v666
  %688 = vst [vmem:[%s675 + $0x60] sm:$0xff] %v668
  %689 = vst [vmem:[%s675 + $0x68] sm:$0xff] %v670
  %690 = vst [vmem:[%s675 + $0x70] sm:$0xff] %v672
  %691 = vst [vmem:[%s675 + $0x78] sm:$0xff] %v674
  %s692 = scalar_lea.vmem %s0, 896
  %v693 = vld [vmem:[%s692] sm:$0xff]
  %v694 = vld [vmem:[%s692 + $0x8] sm:$0xff]
  %v695 = vld [vmem:[%s692 + $0x10] sm:$0xff]
  %v696 = vld [vmem:[%s692 + $0x18] sm:$0xff]
  %v697 = vld [vmem:[%s692 + $0x20] sm:$0xff]
  %v698 = vld [vmem:[%s692 + $0x28] sm:$0xff]
  %v699 = vld [vmem:[%s692 + $0x30] sm:$0xff]
  %v700 = vld [vmem:[%s692 + $0x38] sm:$0xff]
  %v701 = vld [vmem:[%s692 + $0x40] sm:$0xff]
  %v702 = vld [vmem:[%s692 + $0x48] sm:$0xff]
  %v703 = vld [vmem:[%s692 + $0x50] sm:$0xff]
  %v704 = vld [vmem:[%s692 + $0x58] sm:$0xff]
  %v705 = vld [vmem:[%s692 + $0x60] sm:$0xff]
  %v706 = vld [vmem:[%s692 + $0x68] sm:$0xff]
  %v707 = vld [vmem:[%s692 + $0x70] sm:$0xff]
  %v708 = vld [vmem:[%s692 + $0x78] sm:$0xff]
  %v709 = vsub.f32 %v693, 1.0
  %v710 = vsub.f32 %v694, 1.0
  %v711 = vsub.f32 %v695, 1.0
  %v712 = vsub.f32 %v696, 1.0
  %v713 = vsub.f32 %v697, 1.0
  %v714 = vsub.f32 %v698, 1.0
  %v715 = vsub.f32 %v699, 1.0
  %v716 = vsub.f32 %v700, 1.0
  %v717 = vsub.f32 %v701, 1.0
  %v718 = vsub.f32 %v702, 1.0
  %v719 = vsub.f32 %v703, 1.0
  %v720 = vsub.f32 %v704, 1.0
  %v721 = vsub.f32 %v705, 1.0
  %v722 = vsub.f32 %v706, 1.0
  %v723 = vsub.f32 %v707, 1.0
  %v724 = vsub.f32 %v708, 1.0
  %v725 = vmul.f32 %v709, 10.0
  %v726 = vmul.f32 %v710, 10.0
  %v727 = vmul.f32 %v711, 10.0
  %v728 = vmul.f32 %v712, 10.0
  %v729 = vmul.f32 %v713, 10.0
  %v730 = vmul.f32 %v714, 10.0
  %v731 = vmul.f32 %v715, 10.0
  %v732 = vmul.f32 %v716, 10.0
  %v733 = vmul.f32 %v717, 10.0
  %v734 = vmul.f32 %v718, 10.0
  %v735 = vmul.f32 %v719, 10.0
  %v736 = vmul.f32 %v720, 10.0
  %v737 = vmul.f32 %v721, 10.0
  %v738 = vmul.f32 %v722, 10.0
  %v739 = vmul.f32 %v723, 10.0
  %v740 = vmul.f32 %v724, 10.0
  %v741 = vmul.f32 %v725, 1.442695
  %v742 = vpow.pop %v741
  %v743 = vmul.f32 %v726, 1.442695
  %v744 = vpow.pop %v743
  %v745 = vmul.f32 %v727, 1.442695
  %v746 = vpow.pop %v745
  %v747 = vmul.f32 %v728, 1.442695
  %v748 = vpow.pop %v747
  %v749 = vmul.f32 %v729, 1.442695
  %v750 = vpow.pop %v749
  %v751 = vmul.f32 %v730, 1.442695
  %v752 = vpow.pop %v751
  %v753 = vmul.f32 %v731, 1.442695
  %v754 = vpow.pop %v753
  %v755 = vmul.f32 %v732, 1.442695
  %v756 = vpow.pop %v755
  %v757 = vmul.f32 %v733, 1.442695
  %v758 = vpow.pop %v757
  %v759 = vmul.f32 %v734, 1.442695
  %v760 = vpow.pop %v759
  %v761 = vmul.f32 %v735, 1.442695
  %v762 = vpow.pop %v761
  %v763 = vmul.f32 %v736, 1.442695
  %v764 = vpow.pop %v763
  %v765 = vmul.f32 %v737, 1.442695
  %v766 = vpow.pop %v765
  %v767 = vmul.f32 %v738, 1.442695
  %v768 = vpow.pop %v767
  %v769 = vmul.f32 %v739, 1.442695
  %v770 = vpow.pop %v769
  %v771 = vmul.f32 %v740, 1.442695
  %v772 = vpow.pop %v771
  %s773 = scalar_lea.vmem [#allocation2], 896
  %774 = vst [vmem:[%s773] sm:$0xff] %v742
  %775 = vst [vmem:[%s773 + $0x8] sm:$0xff] %v744
  %776 = vst [vmem:[%s773 + $0x10] sm:$0xff] %v746
  %777 = vst [vmem:[%s773 + $0x18] sm:$0xff] %v748
  %778 = vst [vmem:[%s773 + $0x20] sm:$0xff] %v750
  %779 = vst [vmem:[%s773 + $0x28] sm:$0xff] %v752
  %780 = vst [vmem:[%s773 + $0x30] sm:$0xff] %v754
  %781 = vst [vmem:[%s773 + $0x38] sm:$0xff] %v756
  %782 = vst [vmem:[%s773 + $0x40] sm:$0xff] %v758
  %783 = vst [vmem:[%s773 + $0x48] sm:$0xff] %v760
  %784 = vst [vmem:[%s773 + $0x50] sm:$0xff] %v762
  %785 = vst [vmem:[%s773 + $0x58] sm:$0xff] %v764
  %786 = vst [vmem:[%s773 + $0x60] sm:$0xff] %v766
  %787 = vst [vmem:[%s773 + $0x68] sm:$0xff] %v768
  %788 = vst [vmem:[%s773 + $0x70] sm:$0xff] %v770
  %789 = vst [vmem:[%s773 + $0x78] sm:$0xff] %v772
  %v790 = vld [vmem:[#allocation2] sm:$0xff]
  %v791 = vld [vmem:[#allocation2 + $0x8] sm:$0xff]
  %s792 = scalar_lea.vmem [#allocation2], 16
  %v793 = vld [vmem:[%s792] sm:$0xff]
  %v794 = vld [vmem:[%s792 + $0x8] sm:$0xff]
  %v795 = vmul.f32 %v793, %v790
  %v796 = vmul.f32 %v794, %v791
  %s797 = scalar_lea.vmem [#allocation2], 32
  %v798 = vld [vmem:[%s797] sm:$0xff]
  %v799 = vld [vmem:[%s797 + $0x8] sm:$0xff]
  %v800 = vmul.f32 %v798, %v795
  %v801 = vmul.f32 %v799, %v796
  %s802 = scalar_lea.vmem [#allocation2], 48
  %v803 = vld [vmem:[%s802] sm:$0xff]
  %v804 = vld [vmem:[%s802 + $0x8] sm:$0xff]
  %v805 = vmul.f32 %v803, %v800
  %v806 = vmul.f32 %v804, %v801
  %s807 = scalar_lea.vmem [#allocation2], 64
  %v808 = vld [vmem:[%s807] sm:$0xff]
  %v809 = vld [vmem:[%s807 + $0x8] sm:$0xff]
  %v810 = vmul.f32 %v808, %v805
  %v811 = vmul.f32 %v809, %v806
  %s812 = scalar_lea.vmem [#allocation2], 80
  %v813 = vld [vmem:[%s812] sm:$0xff]
  %v814 = vld [vmem:[%s812 + $0x8] sm:$0xff]
  %v815 = vmul.f32 %v813, %v810
  %v816 = vmul.f32 %v814, %v811
  %s817 = scalar_lea.vmem [#allocation2], 96
  %v818 = vld [vmem:[%s817] sm:$0xff]
  %v819 = vld [vmem:[%s817 + $0x8] sm:$0xff]
  %v820 = vmul.f32 %v818, %v815
  %v821 = vmul.f32 %v819, %v816
  %s822 = scalar_lea.vmem [#allocation2], 112
  %v823 = vld [vmem:[%s822] sm:$0xff]
  %v824 = vld [vmem:[%s822 + $0x8] sm:$0xff]
  %v825 = vmul.f32 %v823, %v820
  %v826 = vmul.f32 %v824, %v821
  %v827 = vld [vmem:[%s185] sm:$0xff]
  %v828 = vld [vmem:[%s185 + $0x8] sm:$0xff]
  %v829 = vadd.f32 %v790, 1.0
  %v830 = vadd.f32 %v791, 1.0
  %v831 = vadd.f32 %v829, 1.0
  %v832 = vadd.f32 %v830, 1.0
  %v833 = vmul.f32 %v827, %v831
  %v834 = vmul.f32 %v828, %v832
  %s835 = scalar_lea.vmem [#allocation2], 144
  %v836 = vld [vmem:[%s835] sm:$0xff]
  %v837 = vld [vmem:[%s835 + $0x8] sm:$0xff]
  %v838 = vadd.f32 %v790, %v833
  %v839 = vadd.f32 %v791, %v834
  %v840 = vmul.f32 %v836, %v838
  %v841 = vmul.f32 %v837, %v839
  %s842 = scalar_lea.vmem [#allocation2], 160
  %v843 = vld [vmem:[%s842] sm:$0xff]
  %v844 = vld [vmem:[%s842 + $0x8] sm:$0xff]
  %v845 = vadd.f32 %v795, %v840
  %v846 = vadd.f32 %v796, %v841
  %v847 = vmul.f32 %v843, %v845
  %v848 = vmul.f32 %v844, %v846
  %s849 = scalar_lea.vmem [#allocation2], 176
  %v850 = vld [vmem:[%s849] sm:$0xff]
  %v851 = vld [vmem:[%s849 + $0x8] sm:$0xff]
  %v852 = vadd.f32 %v800, %v847
  %v853 = vadd.f32 %v801, %v848
  %v854 = vmul.f32 %v850, %v852
  %v855 = vmul.f32 %v851, %v853
  %s856 = scalar_lea.vmem [#allocation2], 192
  %v857 = vld [vmem:[%s856] sm:$0xff]
  %v858 = vld [vmem:[%s856 + $0x8] sm:$0xff]
  %v859 = vadd.f32 %v805, %v854
  %v860 = vadd.f32 %v806, %v855
  %v861 = vmul.f32 %v857, %v859
  %v862 = vmul.f32 %v858, %v860
  %s863 = scalar_lea.vmem [#allocation2], 208
  %v864 = vld [vmem:[%s863] sm:$0xff]
  %v865 = vld [vmem:[%s863 + $0x8] sm:$0xff]
  %v866 = vadd.f32 %v810, %v861
  %v867 = vadd.f32 %v811, %v862
  %v868 = vmul.f32 %v864, %v866
  %v869 = vmul.f32 %v865, %v867
  %s870 = scalar_lea.vmem [#allocation2], 224
  %v871 = vld [vmem:[%s870] sm:$0xff]
  %v872 = vld [vmem:[%s870 + $0x8] sm:$0xff]
  %v873 = vadd.f32 %v815, %v868
  %v874 = vadd.f32 %v816, %v869
  %v875 = vmul.f32 %v871, %v873
  %v876 = vmul.f32 %v872, %v874
  %s877 = scalar_lea.vmem [#allocation2], 240
  %v878 = vld [vmem:[%s877] sm:$0xff]
  %v879 = vld [vmem:[%s877 + $0x8] sm:$0xff]
  %v880 = vadd.f32 %v820, %v875
  %v881 = vadd.f32 %v821, %v876
  %v882 = vmul.f32 %v878, %v880
  %v883 = vmul.f32 %v879, %v881
  %v884 = vadd.f32 %v825, %v825
  %v885 = vadd.f32 %v826, %v826
  %v886 = vadd.f32 %v884, %v882
  %v887 = vadd.f32 %v885, %v883
  %v888 = vld [vmem:[%s283] sm:$0xff]
  %v889 = vld [vmem:[%s283 + $0x8] sm:$0xff]
  %v890 = vadd.f32 %v833, 1.0
  %v891 = vadd.f32 %v834, 1.0
  %v892 = vadd.f32 %v890, 1.0
  %v893 = vadd.f32 %v891, 1.0
  %v894 = vmul.f32 %v888, %v892
  %v895 = vmul.f32 %v889, %v893
  %s896 = scalar_lea.vmem [#allocation2], 272
  %v897 = vld [vmem:[%s896] sm:$0xff]
  %v898 = vld [vmem:[%s896 + $0x8] sm:$0xff]
  %v899 = vadd.f32 %v833, %v894
  %v900 = vadd.f32 %v834, %v895
  %v901 = vmul.f32 %v897, %v899
  %v902 = vmul.f32 %v898, %v900
  %s903 = scalar_lea.vmem [#allocation2], 288
  %v904 = vld [vmem:[%s903] sm:$0xff]
  %v905 = vld [vmem:[%s903 + $0x8] sm:$0xff]
  %v906 = vadd.f32 %v840, %v901
  %v907 = vadd.f32 %v841, %v902
  %v908 = vmul.f32 %v904, %v906
  %v909 = vmul.f32 %v905, %v907
  %s910 = scalar_lea.vmem [#allocation2], 304
  %v911 = vld [vmem:[%s910] sm:$0xff]
  %v912 = vld [vmem:[%s910 + $0x8] sm:$0xff]
  %v913 = vadd.f32 %v847, %v908
  %v914 = vadd.f32 %v848, %v909
  %v915 = vmul.f32 %v911, %v913
  %v916 = vmul.f32 %v912, %v914
  %s917 = scalar_lea.vmem [#allocation2], 320
  %v918 = vld [vmem:[%s917] sm:$0xff]
  %v919 = vld [vmem:[%s917 + $0x8] sm:$0xff]
  %v920 = vadd.f32 %v854, %v915
  %v921 = vadd.f32 %v855, %v916
  %v922 = vmul.f32 %v918, %v920
  %v923 = vmul.f32 %v919, %v921
  %s924 = scalar_lea.vmem [#allocation2], 336
  %v925 = vld [vmem:[%s924] sm:$0xff]
  %v926 = vld [vmem:[%s924 + $0x8] sm:$0xff]
  %v927 = vadd.f32 %v861, %v922
  %v928 = vadd.f32 %v862, %v923
  %v929 = vmul.f32 %v925, %v927
  %v930 = vmul.f32 %v926, %v928
  %s931 = scalar_lea.vmem [#allocation2], 352
  %v932 = vld [vmem:[%s931] sm:$0xff]
  %v933 = vld [vmem:[%s931 + $0x8] sm:$0xff]
  %v934 = vadd.f32 %v868, %v929
  %v935 = vadd.f32 %v869, %v930
  %v936 = vmul.f32 %v932, %v934
  %v937 = vmul.f32 %v933, %v935
  %s938 = scalar_lea.vmem [#allocation2], 368
  %v939 = vld [vmem:[%s938] sm:$0xff]
  %v940 = vld [vmem:[%s938 + $0x8] sm:$0xff]
  %v941 = vadd.f32 %v875, %v936
  %v942 = vadd.f32 %v876, %v937
  %v943 = vmul.f32 %v939, %v941
  %v944 = vmul.f32 %v940, %v942
  %v945 = vadd.f32 %v882, %v886
  %v946 = vadd.f32 %v883, %v887
  %v947 = vadd.f32 %v945, %v943
  %v948 = vadd.f32 %v946, %v944
  %v949 = vld [vmem:[%s381] sm:$0xff]
  %v950 = vld [vmem:[%s381 + $0x8] sm:$0xff]
  %v951 = vadd.f32 %v894, 1.0
  %v952 = vadd.f32 %v895, 1.0
  %v953 = vadd.f32 %v951, 1.0
  %v954 = vadd.f32 %v952, 1.0
  %v955 = vmul.f32 %v949, %v953
  %v956 = vmul.f32 %v950, %v954
  %s957 = scalar_lea.vmem [#allocation2], 400
  %v958 = vld [vmem:[%s957] sm:$0xff]
  %v959 = vld [vmem:[%s957 + $0x8] sm:$0xff]
  %v960 = vadd.f32 %v894, %v955
  %v961 = vadd.f32 %v895, %v956
  %v962 = vmul.f32 %v958, %v960
  %v963 = vmul.f32 %v959, %v961
  %s964 = scalar_lea.vmem [#allocation2], 416
  %v965 = vld [vmem:[%s964] sm:$0xff]
  %v966 = vld [vmem:[%s964 + $0x8] sm:$0xff]
  %v967 = vadd.f32 %v901, %v962
  %v968 = vadd.f32 %v902, %v963
  %v969 = vmul.f32 %v965, %v967
  %v970 = vmul.f32 %v966, %v968
  %s971 = scalar_lea.vmem [#allocation2], 432
  %v972 = vld [vmem:[%s971] sm:$0xff]
  %v973 = vld [vmem:[%s971 + $0x8] sm:$0xff]
  %v974 = vadd.f32 %v908, %v969
  %v975 = vadd.f32 %v909, %v970
  %v976 = vmul.f32 %v972, %v974
  %v977 = vmul.f32 %v973, %v975
  %s978 = scalar_lea.vmem [#allocation2], 448
  %v979 = vld [vmem:[%s978] sm:$0xff]
  %v980 = vld [vmem:[%s978 + $0x8] sm:$0xff]
  %v981 = vadd.f32 %v915, %v976
  %v982 = vadd.f32 %v916, %v977
  %v983 = vmul.f32 %v979, %v981
  %v984 = vmul.f32 %v980, %v982
  %s985 = scalar_lea.vmem [#allocation2], 464
  %v986 = vld [vmem:[%s985] sm:$0xff]
  %v987 = vld [vmem:[%s985 + $0x8] sm:$0xff]
  %v988 = vadd.f32 %v922, %v983
  %v989 = vadd.f32 %v923, %v984
  %v990 = vmul.f32 %v986, %v988
  %v991 = vmul.f32 %v987, %v989
  %s992 = scalar_lea.vmem [#allocation2], 480
  %v993 = vld [vmem:[%s992] sm:$0xff]
  %v994 = vld [vmem:[%s992 + $0x8] sm:$0xff]
  %v995 = vadd.f32 %v929, %v990
  %v996 = vadd.f32 %v930, %v991
  %v997 = vmul.f32 %v993, %v995
  %v998 = vmul.f32 %v994, %v996
  %s999 = scalar_lea.vmem [#allocation2], 496
  %v1000 = vld [vmem:[%s999] sm:$0xff]
  %v1001 = vld [vmem:[%s999 + $0x8] sm:$0xff]
  %v1002 = vadd.f32 %v936, %v997
  %v1003 = vadd.f32 %v937, %v998
  %v1004 = vmul.f32 %v1000, %v1002
  %v1005 = vmul.f32 %v1001, %v1003
  %v1006 = vadd.f32 %v943, %v947
  %v1007 = vadd.f32 %v944, %v948
  %v1008 = vadd.f32 %v1006, %v1004
  %v1009 = vadd.f32 %v1007, %v1005
  %v1010 = vld [vmem:[%s479] sm:$0xff]
  %v1011 = vld [vmem:[%s479 + $0x8] sm:$0xff]
  %v1012 = vadd.f32 %v955, 1.0
  %v1013 = vadd.f32 %v956, 1.0
  %v1014 = vadd.f32 %v1012, 1.0
  %v1015 = vadd.f32 %v1013, 1.0
  %v1016 = vmul.f32 %v1010, %v1014
  %v1017 = vmul.f32 %v1011, %v1015
  %s1018 = scalar_lea.vmem [#allocation2], 528
  %v1019 = vld [vmem:[%s1018] sm:$0xff]
  %v1020 = vld [vmem:[%s1018 + $0x8] sm:$0xff]
  %v1021 = vadd.f32 %v955, %v1016
  %v1022 = vadd.f32 %v956, %v1017
  %v1023 = vmul.f32 %v1019, %v1021
  %v1024 = vmul.f32 %v1020, %v1022
  %s1025 = scalar_lea.vmem [#allocation2], 544
  %v1026 = vld [vmem:[%s1025] sm:$0xff]
  %v1027 = vld [vmem:[%s1025 + $0x8] sm:$0xff]
  %v1028 = vadd.f32 %v962, %v1023
  %v1029 = vadd.f32 %v963, %v1024
  %v1030 = vmul.f32 %v1026, %v1028
  %v1031 = vmul.f32 %v1027, %v1029
  %s1032 = scalar_lea.vmem [#allocation2], 560
  %v1033 = vld [vmem:[%s1032] sm:$0xff]
  %v1034 = vld [vmem:[%s1032 + $0x8] sm:$0xff]
  %v1035 = vadd.f32 %v969, %v1030
  %v1036 = vadd.f32 %v970, %v1031
  %v1037 = vmul.f32 %v1033, %v1035
  %v1038 = vmul.f32 %v1034, %v1036
  %s1039 = scalar_lea.vmem [#allocation2], 576
  %v1040 = vld [vmem:[%s1039] sm:$0xff]
  %v1041 = vld [vmem:[%s1039 + $0x8] sm:$0xff]
  %v1042 = vadd.f32 %v976, %v1037
  %v1043 = vadd.f32 %v977, %v1038
  %v1044 = vmul.f32 %v1040, %v1042
  %v1045 = vmul.f32 %v1041, %v1043
  %s1046 = scalar_lea.vmem [#allocation2], 592
  %v1047 = vld [vmem:[%s1046] sm:$0xff]
  %v1048 = vld [vmem:[%s1046 + $0x8] sm:$0xff]
  %v1049 = vadd.f32 %v983, %v1044
  %v1050 = vadd.f32 %v984, %v1045
  %v1051 = vmul.f32 %v1047, %v1049
  %v1052 = vmul.f32 %v1048, %v1050
  %s1053 = scalar_lea.vmem [#allocation2], 608
  %v1054 = vld [vmem:[%s1053] sm:$0xff]
  %v1055 = vld [vmem:[%s1053 + $0x8] sm:$0xff]
  %v1056 = vadd.f32 %v990, %v1051
  %v1057 = vadd.f32 %v991, %v1052
  %v1058 = vmul.f32 %v1054, %v1056
  %v1059 = vmul.f32 %v1055, %v1057
  %s1060 = scalar_lea.vmem [#allocation2], 624
  %v1061 = vld [vmem:[%s1060] sm:$0xff]
  %v1062 = vld [vmem:[%s1060 + $0x8] sm:$0xff]
  %v1063 = vadd.f32 %v997, %v1058
  %v1064 = vadd.f32 %v998, %v1059
  %v1065 = vmul.f32 %v1061, %v1063
  %v1066 = vmul.f32 %v1062, %v1064
  %v1067 = vadd.f32 %v1004, %v1008
  %v1068 = vadd.f32 %v1005, %v1009
  %v1069 = vadd.f32 %v1067, %v1065
  %v1070 = vadd.f32 %v1068, %v1066
  %v1071 = vld [vmem:[%s577] sm:$0xff]
  %v1072 = vld [vmem:[%s577 + $0x8] sm:$0xff]
  %v1073 = vadd.f32 %v1016, 1.0
  %v1074 = vadd.f32 %v1017, 1.0
  %v1075 = vadd.f32 %v1073, 1.0
  %v1076 = vadd.f32 %v1074, 1.0
  %v1077 = vmul.f32 %v1071, %v1075
  %v1078 = vmul.f32 %v1072, %v1076
  %s1079 = scalar_lea.vmem [#allocation2], 656
  %v1080 = vld [vmem:[%s1079] sm:$0xff]
  %v1081 = vld [vmem:[%s1079 + $0x8] sm:$0xff]
  %v1082 = vadd.f32 %v1016, %v1077
  %v1083 = vadd.f32 %v1017, %v1078
  %v1084 = vmul.f32 %v1080, %v1082
  %v1085 = vmul.f32 %v1081, %v1083
  %s1086 = scalar_lea.vmem [#allocation2], 672
  %v1087 = vld [vmem:[%s1086] sm:$0xff]
  %v1088 = vld [vmem:[%s1086 + $0x8] sm:$0xff]
  %v1089 = vadd.f32 %v1023, %v1084
  %v1090 = vadd.f32 %v1024, %v1085
  %v1091 = vmul.f32 %v1087, %v1089
  %v1092 = vmul.f32 %v1088, %v1090
  %s1093 = scalar_lea.vmem [#allocation2], 688
  %v1094 = vld [vmem:[%s1093] sm:$0xff]
  %v1095 = vld [vmem:[%s1093 + $0x8] sm:$0xff]
  %v1096 = vadd.f32 %v1030, %v1091
  %v1097 = vadd.f32 %v1031, %v1092
  %v1098 = vmul.f32 %v1094, %v1096
  %v1099 = vmul.f32 %v1095, %v1097
  %s1100 = scalar_lea.vmem [#allocation2], 704
  %v1101 = vld [vmem:[%s1100] sm:$0xff]
  %v1102 = vld [vmem:[%s1100 + $0x8] sm:$0xff]
  %v1103 = vadd.f32 %v1037, %v1098
  %v1104 = vadd.f32 %v1038, %v1099
  %v1105 = vmul.f32 %v1101, %v1103
  %v1106 = vmul.f32 %v1102, %v1104
  %s1107 = scalar_lea.vmem [#allocation2], 720
  %v1108 = vld [vmem:[%s1107] sm:$0xff]
  %v1109 = vld [vmem:[%s1107 + $0x8] sm:$0xff]
  %v1110 = vadd.f32 %v1044, %v1105
  %v1111 = vadd.f32 %v1045, %v1106
  %v1112 = vmul.f32 %v1108, %v1110
  %v1113 = vmul.f32 %v1109, %v1111
  %s1114 = scalar_lea.vmem [#allocation2], 736
  %v1115 = vld [vmem:[%s1114] sm:$0xff]
  %v1116 = vld [vmem:[%s1114 + $0x8] sm:$0xff]
  %v1117 = vadd.f32 %v1051, %v1112
  %v1118 = vadd.f32 %v1052, %v1113
  %v1119 = vmul.f32 %v1115, %v1117
  %v1120 = vmul.f32 %v1116, %v1118
  %s1121 = scalar_lea.vmem [#allocation2], 752
  %v1122 = vld [vmem:[%s1121] sm:$0xff]
  %v1123 = vld [vmem:[%s1121 + $0x8] sm:$0xff]
  %v1124 = vadd.f32 %v1058, %v1119
  %v1125 = vadd.f32 %v1059, %v1120
  %v1126 = vmul.f32 %v1122, %v1124
  %v1127 = vmul.f32 %v1123, %v1125
  %v1128 = vadd.f32 %v1065, %v1069
  %v1129 = vadd.f32 %v1066, %v1070
  %v1130 = vadd.f32 %v1128, %v1126
  %v1131 = vadd.f32 %v1129, %v1127
  %v1132 = vld [vmem:[%s675] sm:$0xff]
  %v1133 = vld [vmem:[%s675 + $0x8] sm:$0xff]
  %v1134 = vadd.f32 %v1077, 1.0
  %v1135 = vadd.f32 %v1078, 1.0
  %v1136 = vadd.f32 %v1134, 1.0
  %v1137 = vadd.f32 %v1135, 1.0
  %v1138 = vmul.f32 %v1132, %v1136
  %v1139 = vmul.f32 %v1133, %v1137
  %s1140 = scalar_lea.vmem [#allocation2], 784
  %v1141 = vld [vmem:[%s1140] sm:$0xff]
  %v1142 = vld [vmem:[%s1140 + $0x8] sm:$0xff]
  %v1143 = vadd.f32 %v1077, %v1138
  %v1144 = vadd.f32 %v1078, %v1139
  %v1145 = vmul.f32 %v1141, %v1143
  %v1146 = vmul.f32 %v1142, %v1144
  %s1147 = scalar_lea.vmem [#allocation2], 800
  %v1148 = vld [vmem:[%s1147] sm:$0xff]
  %v1149 = vld [vmem:[%s1147 + $0x8] sm:$0xff]
  %v1150 = vadd.f32 %v1084, %v1145
  %v1151 = vadd.f32 %v1085, %v1146
  %v1152 = vmul.f32 %v1148, %v1150
  %v1153 = vmul.f32 %v1149, %v1151
  %s1154 = scalar_lea.vmem [#allocation2], 816
  %v1155 = vld [vmem:[%s1154] sm:$0xff]
  %v1156 = vld [vmem:[%s1154 + $0x8] sm:$0xff]
  %v1157 = vadd.f32 %v1091, %v1152
  %v1158 = vadd.f32 %v1092, %v1153
  %v1159 = vmul.f32 %v1155, %v1157
  %v1160 = vmul.f32 %v1156, %v1158
  %s1161 = scalar_lea.vmem [#allocation2], 832
  %v1162 = vld [vmem:[%s1161] sm:$0xff]
  %v1163 = vld [vmem:[%s1161 + $0x8] sm:$0xff]
  %v1164 = vadd.f32 %v1098, %v1159
  %v1165 = vadd.f32 %v1099, %v1160
  %v1166 = vmul.f32 %v1162, %v1164
  %v1167 = vmul.f32 %v1163, %v1165
  %s1168 = scalar_lea.vmem [#allocation2], 848
  %v1169 = vld [vmem:[%s1168] sm:$0xff]
  %v1170 = vld [vmem:[%s1168 + $0x8] sm:$0xff]
  %v1171 = vadd.f32 %v1105, %v1166
  %v1172 = vadd.f32 %v1106, %v1167
  %v1173 = vmul.f32 %v1169, %v1171
  %v1174 = vmul.f32 %v1170, %v1172
  %s1175 = scalar_lea.vmem [#allocation2], 864
  %v1176 = vld [vmem:[%s1175] sm:$0xff]
  %v1177 = vld [vmem:[%s1175 + $0x8] sm:$0xff]
  %v1178 = vadd.f32 %v1112, %v1173
  %v1179 = vadd.f32 %v1113, %v1174
  %v1180 = vmul.f32 %v1176, %v1178
  %v1181 = vmul.f32 %v1177, %v1179
  %s1182 = scalar_lea.vmem [#allocation2], 880
  %v1183 = vld [vmem:[%s1182] sm:$0xff]
  %v1184 = vld [vmem:[%s1182 + $0x8] sm:$0xff]
  %v1185 = vadd.f32 %v1119, %v1180
  %v1186 = vadd.f32 %v1120, %v1181
  %v1187 = vmul.f32 %v1183, %v1185
  %v1188 = vmul.f32 %v1184, %v1186
  %v1189 = vadd.f32 %v1126, %v1130
  %v1190 = vadd.f32 %v1127, %v1131
  %v1191 = vadd.f32 %v1189, %v1187
  %v1192 = vadd.f32 %v1190, %v1188
  %v1193 = vld [vmem:[%s773] sm:$0xff]
  %v1194 = vld [vmem:[%s773 + $0x8] sm:$0xff]
  %v1195 = vadd.f32 %v1138, 1.0
  %v1196 = vadd.f32 %v1139, 1.0
  %v1197 = vadd.f32 %v1195, 1.0
  %v1198 = vadd.f32 %v1196, 1.0
  %v1199 = vmul.f32 %v1193, %v1197
  %v1200 = vmul.f32 %v1194, %v1198
  %s1201 = scalar_lea.vmem [#allocation2], 912
  %v1202 = vld [vmem:[%s1201] sm:$0xff]
  %v1203 = vld [vmem:[%s1201 + $0x8] sm:$0xff]
  %v1204 = vadd.f32 %v1138, %v1199
  %v1205 = vadd.f32 %v1139, %v1200
  %v1206 = vmul.f32 %v1202, %v1204
  %v1207 = vmul.f32 %v1203, %v1205
  %s1208 = scalar_lea.vmem [#allocation2], 928
  %v1209 = vld [vmem:[%s1208] sm:$0xff]
  %v1210 = vld [vmem:[%s1208 + $0x8] sm:$0xff]
  %v1211 = vadd.f32 %v1145, %v1206
  %v1212 = vadd.f32 %v1146, %v1207
  %v1213 = vmul.f32 %v1209, %v1211
  %v1214 = vmul.f32 %v1210, %v1212
  %s1215 = scalar_lea.vmem [#allocation2], 944
  %v1216 = vld [vmem:[%s1215] sm:$0xff]
  %v1217 = vld [vmem:[%s1215 + $0x8] sm:$0xff]
  %v1218 = vadd.f32 %v1152, %v1213
  %v1219 = vadd.f32 %v1153, %v1214
  %v1220 = vmul.f32 %v1216, %v1218
  %v1221 = vmul.f32 %v1217, %v1219
  %s1222 = scalar_lea.vmem [#allocation2], 960
  %v1223 = vld [vmem:[%s1222] sm:$0xff]
  %v1224 = vld [vmem:[%s1222 + $0x8] sm:$0xff]
  %v1225 = vadd.f32 %v1159, %v1220
  %v1226 = vadd.f32 %v1160, %v1221
  %v1227 = vmul.f32 %v1223, %v1225
  %v1228 = vmul.f32 %v1224, %v1226
  %s1229 = scalar_lea.vmem [#allocation2], 976
  %v1230 = vld [vmem:[%s1229] sm:$0xff]
  %v1231 = vld [vmem:[%s1229 + $0x8] sm:$0xff]
  %v1232 = vadd.f32 %v1166, %v1227
  %v1233 = vadd.f32 %v1167, %v1228
  %v1234 = vmul.f32 %v1230, %v1232
  %v1235 = vmul.f32 %v1231, %v1233
  %s1236 = scalar_lea.vmem [#allocation2], 992
  %v1237 = vld [vmem:[%s1236] sm:$0xff]
  %v1238 = vld [vmem:[%s1236 + $0x8] sm:$0xff]
  %v1239 = vadd.f32 %v1173, %v1234
  %v1240 = vadd.f32 %v1174, %v1235
  %v1241 = vmul.f32 %v1237, %v1239
  %v1242 = vmul.f32 %v1238, %v1240
  %s1243 = scalar_lea.vmem [#allocation2], 1008
  %v1244 = vld [vmem:[%s1243] sm:$0xff]
  %v1245 = vld [vmem:[%s1243 + $0x8] sm:$0xff]
  %v1246 = vadd.f32 %v1180, %v1241
  %v1247 = vadd.f32 %v1181, %v1242
  %v1248 = vmul.f32 %v1244, %v1246
  %v1249 = vmul.f32 %v1245, %v1247
  %v1250 = vadd.f32 %v1187, %v1191
  %v1251 = vadd.f32 %v1188, %v1192
  %v1252 = vadd.f32 %v1250, %v1248
  %v1253 = vadd.f32 %v1251, %v1249
  %v1254 = vmul.f32 %v827, %v790
  %v1255 = vmul.f32 %v828, %v791
  %v1256 = vmul.f32 %v888, %v1254
  %v1257 = vmul.f32 %v889, %v1255
  %v1258 = vmul.f32 %v949, %v1256
  %v1259 = vmul.f32 %v950, %v1257
  %v1260 = vmul.f32 %v1010, %v1258
  %v1261 = vmul.f32 %v1011, %v1259
  %v1262 = vmul.f32 %v1071, %v1260
  %v1263 = vmul.f32 %v1072, %v1261
  %v1264 = vmul.f32 %v1132, %v1262
  %v1265 = vmul.f32 %v1133, %v1263
  %v1266 = vmul.f32 %v1193, %v1264
  %v1267 = vmul.f32 %v1194, %v1265
  %v1268 = vmul.f32 %v793, %v831
  %v1269 = vmul.f32 %v794, %v832
  %v1270 = vadd.f32 %v790, %v1268
  %v1271 = vadd.f32 %v791, %v1269
  %v1272 = vmul.f32 %v836, %v1270
  %v1273 = vmul.f32 %v837, %v1271
  %v1274 = vadd.f32 %v1254, %v1272
  %v1275 = vadd.f32 %v1255, %v1273
  %v1276 = vmul.f32 %v897, %v1274
  %v1277 = vmul.f32 %v898, %v1275
  %v1278 = vadd.f32 %v1256, %v1276
  %v1279 = vadd.f32 %v1257, %v1277
  %v1280 = vmul.f32 %v958, %v1278
  %v1281 = vmul.f32 %v959, %v1279
  %v1282 = vadd.f32 %v1258, %v1280
  %v1283 = vadd.f32 %v1259, %v1281
  %v1284 = vmul.f32 %v1019, %v1282
  %v1285 = vmul.f32 %v1020, %v1283
  %v1286 = vadd.f32 %v1260, %v1284
  %v1287 = vadd.f32 %v1261, %v1285
  %v1288 = vmul.f32 %v1080, %v1286
  %v1289 = vmul.f32 %v1081, %v1287
  %v1290 = vadd.f32 %v1262, %v1288
  %v1291 = vadd.f32 %v1263, %v1289
  %v1292 = vmul.f32 %v1141, %v1290
  %v1293 = vmul.f32 %v1142, %v1291
  %v1294 = vadd.f32 %v1264, %v1292
  %v1295 = vadd.f32 %v1265, %v1293
  %v1296 = vmul.f32 %v1202, %v1294
  %v1297 = vmul.f32 %v1203, %v1295
  %v1298 = vadd.f32 %v1266, %v1266
  %v1299 = vadd.f32 %v1267, %v1267
  %v1300 = vadd.f32 %v1298, %v1296
  %v1301 = vadd.f32 %v1299, %v1297
  %v1302 = vadd.f32 %v1268, 1.0
  %v1303 = vadd.f32 %v1269, 1.0
  %v1304 = vadd.f32 %v1302, 1.0
  %v1305 = vadd.f32 %v1303, 1.0
  %v1306 = vmul.f32 %v798, %v1304
  %v1307 = vmul.f32 %v799, %v1305
  %v1308 = vadd.f32 %v1268, %v1306
  %v1309 = vadd.f32 %v1269, %v1307
  %v1310 = vmul.f32 %v843, %v1308
  %v1311 = vmul.f32 %v844, %v1309
  %v1312 = vadd.f32 %v1272, %v1310
  %v1313 = vadd.f32 %v1273, %v1311
  %v1314 = vmul.f32 %v904, %v1312
  %v1315 = vmul.f32 %v905, %v1313
  %v1316 = vadd.f32 %v1276, %v1314
  %v1317 = vadd.f32 %v1277, %v1315
  %v1318 = vmul.f32 %v965, %v1316
  %v1319 = vmul.f32 %v966, %v1317
  %v1320 = vadd.f32 %v1280, %v1318
  %v1321 = vadd.f32 %v1281, %v1319
  %v1322 = vmul.f32 %v1026, %v1320
  %v1323 = vmul.f32 %v1027, %v1321
  %v1324 = vadd.f32 %v1284, %v1322
  %v1325 = vadd.f32 %v1285, %v1323
  %v1326 = vmul.f32 %v1087, %v1324
  %v1327 = vmul.f32 %v1088, %v1325
  %v1328 = vadd.f32 %v1288, %v1326
  %v1329 = vadd.f32 %v1289, %v1327
  %v1330 = vmul.f32 %v1148, %v1328
  %v1331 = vmul.f32 %v1149, %v1329
  %v1332 = vadd.f32 %v1292, %v1330
  %v1333 = vadd.f32 %v1293, %v1331
  %v1334 = vmul.f32 %v1209, %v1332
  %v1335 = vmul.f32 %v1210, %v1333
  %v1336 = vadd.f32 %v1296, %v1300
  %v1337 = vadd.f32 %v1297, %v1301
  %v1338 = vadd.f32 %v1336, %v1334
  %v1339 = vadd.f32 %v1337, %v1335
  %v1340 = vadd.f32 %v1306, 1.0
  %v1341 = vadd.f32 %v1307, 1.0
  %v1342 = vadd.f32 %v1340, 1.0
  %v1343 = vadd.f32 %v1341, 1.0
  %v1344 = vmul.f32 %v803, %v1342
  %v1345 = vmul.f32 %v804, %v1343
  %v1346 = vadd.f32 %v1306, %v1344
  %v1347 = vadd.f32 %v1307, %v1345
  %v1348 = vmul.f32 %v850, %v1346
  %v1349 = vmul.f32 %v851, %v1347
  %v1350 = vadd.f32 %v1310, %v1348
  %v1351 = vadd.f32 %v1311, %v1349
  %v1352 = vmul.f32 %v911, %v1350
  %v1353 = vmul.f32 %v912, %v1351
  %v1354 = vadd.f32 %v1314, %v1352
  %v1355 = vadd.f32 %v1315, %v1353
  %v1356 = vmul.f32 %v972, %v1354
  %v1357 = vmul.f32 %v973, %v1355
  %v1358 = vadd.f32 %v1318, %v1356
  %v1359 = vadd.f32 %v1319, %v1357
  %v1360 = vmul.f32 %v1033, %v1358
  %v1361 = vmul.f32 %v1034, %v1359
  %v1362 = vadd.f32 %v1322, %v1360
  %v1363 = vadd.f32 %v1323, %v1361
  %v1364 = vmul.f32 %v1094, %v1362
  %v1365 = vmul.f32 %v1095, %v1363
  %v1366 = vadd.f32 %v1326, %v1364
  %v1367 = vadd.f32 %v1327, %v1365
  %v1368 = vmul.f32 %v1155, %v1366
  %v1369 = vmul.f32 %v1156, %v1367
  %v1370 = vadd.f32 %v1330, %v1368
  %v1371 = vadd.f32 %v1331, %v1369
  %v1372 = vmul.f32 %v1216, %v1370
  %v1373 = vmul.f32 %v1217, %v1371
  %v1374 = vadd.f32 %v1334, %v1338
  %v1375 = vadd.f32 %v1335, %v1339
  %v1376 = vadd.f32 %v1374, %v1372
  %v1377 = vadd.f32 %v1375, %v1373
  %v1378 = vadd.f32 %v1344, 1.0
  %v1379 = vadd.f32 %v1345, 1.0
  %v1380 = vadd.f32 %v1378, 1.0
  %v1381 = vadd.f32 %v1379, 1.0
  %v1382 = vmul.f32 %v808, %v1380
  %v1383 = vmul.f32 %v809, %v1381
  %v1384 = vadd.f32 %v1344, %v1382
  %v1385 = vadd.f32 %v1345, %v1383
  %v1386 = vmul.f32 %v857, %v1384
  %v1387 = vmul.f32 %v858, %v1385
  %v1388 = vadd.f32 %v1348, %v1386
  %v1389 = vadd.f32 %v1349, %v1387
  %v1390 = vmul.f32 %v918, %v1388
  %v1391 = vmul.f32 %v919, %v1389
  %v1392 = vadd.f32 %v1352, %v1390
  %v1393 = vadd.f32 %v1353, %v1391
  %v1394 = vmul.f32 %v979, %v1392
  %v1395 = vmul.f32 %v980, %v1393
  %v1396 = vadd.f32 %v1356, %v1394
  %v1397 = vadd.f32 %v1357, %v1395
  %v1398 = vmul.f32 %v1040, %v1396
  %v1399 = vmul.f32 %v1041, %v1397
  %v1400 = vadd.f32 %v1360, %v1398
  %v1401 = vadd.f32 %v1361, %v1399
  %v1402 = vmul.f32 %v1101, %v1400
  %v1403 = vmul.f32 %v1102, %v1401
  %v1404 = vadd.f32 %v1364, %v1402
  %v1405 = vadd.f32 %v1365, %v1403
  %v1406 = vmul.f32 %v1162, %v1404
  %v1407 = vmul.f32 %v1163, %v1405
  %v1408 = vadd.f32 %v1368, %v1406
  %v1409 = vadd.f32 %v1369, %v1407
  %v1410 = vmul.f32 %v1223, %v1408
  %v1411 = vmul.f32 %v1224, %v1409
  %v1412 = vadd.f32 %v1372, %v1376
  %v1413 = vadd.f32 %v1373, %v1377
  %v1414 = vadd.f32 %v1412, %v1410
  %v1415 = vadd.f32 %v1413, %v1411
  %v1416 = vadd.f32 %v1382, 1.0
  %v1417 = vadd.f32 %v1383, 1.0
  %v1418 = vadd.f32 %v1416, 1.0
  %v1419 = vadd.f32 %v1417, 1.0
  %v1420 = vmul.f32 %v813, %v1418
  %v1421 = vmul.f32 %v814, %v1419
  %v1422 = vadd.f32 %v1382, %v1420
  %v1423 = vadd.f32 %v1383, %v1421
  %v1424 = vmul.f32 %v864, %v1422
  %v1425 = vmul.f32 %v865, %v1423
  %v1426 = vadd.f32 %v1386, %v1424
  %v1427 = vadd.f32 %v1387, %v1425
  %v1428 = vmul.f32 %v925, %v1426
  %v1429 = vmul.f32 %v926, %v1427
  %v1430 = vadd.f32 %v1390, %v1428
  %v1431 = vadd.f32 %v1391, %v1429
  %v1432 = vmul.f32 %v986, %v1430
  %v1433 = vmul.f32 %v987, %v1431
  %v1434 = vadd.f32 %v1394, %v1432
  %v1435 = vadd.f32 %v1395, %v1433
  %v1436 = vmul.f32 %v1047, %v1434
  %v1437 = vmul.f32 %v1048, %v1435
  %v1438 = vadd.f32 %v1398, %v1436
  %v1439 = vadd.f32 %v1399, %v1437
  %v1440 = vmul.f32 %v1108, %v1438
  %v1441 = vmul.f32 %v1109, %v1439
  %v1442 = vadd.f32 %v1402, %v1440
  %v1443 = vadd.f32 %v1403, %v1441
  %v1444 = vmul.f32 %v1169, %v1442
  %v1445 = vmul.f32 %v1170, %v1443
  %v1446 = vadd.f32 %v1406, %v1444
  %v1447 = vadd.f32 %v1407, %v1445
  %v1448 = vmul.f32 %v1230, %v1446
  %v1449 = vmul.f32 %v1231, %v1447
  %v1450 = vadd.f32 %v1410, %v1414
  %v1451 = vadd.f32 %v1411, %v1415
  %v1452 = vadd.f32 %v1450, %v1448
  %v1453 = vadd.f32 %v1451, %v1449
  %v1454 = vadd.f32 %v1420, 1.0
  %v1455 = vadd.f32 %v1421, 1.0
  %v1456 = vadd.f32 %v1454, 1.0
  %v1457 = vadd.f32 %v1455, 1.0
  %v1458 = vmul.f32 %v818, %v1456
  %v1459 = vmul.f32 %v819, %v1457
  %v1460 = vadd.f32 %v1420, %v1458
  %v1461 = vadd.f32 %v1421, %v1459
  %v1462 = vmul.f32 %v871, %v1460
  %v1463 = vmul.f32 %v872, %v1461
  %v1464 = vadd.f32 %v1424, %v1462
  %v1465 = vadd.f32 %v1425, %v1463
  %v1466 = vmul.f32 %v932, %v1464
  %v1467 = vmul.f32 %v933, %v1465
  %v1468 = vadd.f32 %v1428, %v1466
  %v1469 = vadd.f32 %v1429, %v1467
  %v1470 = vmul.f32 %v993, %v1468
  %v1471 = vmul.f32 %v994, %v1469
  %v1472 = vadd.f32 %v1432, %v1470
  %v1473 = vadd.f32 %v1433, %v1471
  %v1474 = vmul.f32 %v1054, %v1472
  %v1475 = vmul.f32 %v1055, %v1473
  %v1476 = vadd.f32 %v1436, %v1474
  %v1477 = vadd.f32 %v1437, %v1475
  %v1478 = vmul.f32 %v1115, %v1476
  %v1479 = vmul.f32 %v1116, %v1477
  %v1480 = vadd.f32 %v1440, %v1478
  %v1481 = vadd.f32 %v1441, %v1479
  %v1482 = vmul.f32 %v1176, %v1480
  %v1483 = vmul.f32 %v1177, %v1481
  %v1484 = vadd.f32 %v1444, %v1482
  %v1485 = vadd.f32 %v1445, %v1483
  %v1486 = vmul.f32 %v1237, %v1484
  %v1487 = vmul.f32 %v1238, %v1485
  %v1488 = vadd.f32 %v1448, %v1452
  %v1489 = vadd.f32 %v1449, %v1453
  %v1490 = vadd.f32 %v1488, %v1486
  %v1491 = vadd.f32 %v1489, %v1487
  %v1492 = vadd.f32 %v1458, 1.0
  %v1493 = vadd.f32 %v1459, 1.0
  %v1494 = vadd.f32 %v1492, 1.0
  %v1495 = vadd.f32 %v1493, 1.0
  %v1496 = vmul.f32 %v823, %v1494
  %v1497 = vmul.f32 %v824, %v1495
  %v1498 = vadd.f32 %v1458, %v1496
  %v1499 = vadd.f32 %v1459, %v1497
  %v1500 = vmul.f32 %v878, %v1498
  %v1501 = vmul.f32 %v879, %v1499
  %v1502 = vadd.f32 %v1462, %v1500
  %v1503 = vadd.f32 %v1463, %v1501
  %v1504 = vmul.f32 %v939, %v1502
  %v1505 = vmul.f32 %v940, %v1503
  %v1506 = vadd.f32 %v1466, %v1504
  %v1507 = vadd.f32 %v1467, %v1505
  %v1508 = vmul.f32 %v1000, %v1506
  %v1509 = vmul.f32 %v1001, %v1507
  %v1510 = vadd.f32 %v1470, %v1508
  %v1511 = vadd.f32 %v1471, %v1509
  %v1512 = vmul.f32 %v1061, %v1510
  %v1513 = vmul.f32 %v1062, %v1511
  %v1514 = vadd.f32 %v1474, %v1512
  %v1515 = vadd.f32 %v1475, %v1513
  %v1516 = vmul.f32 %v1122, %v1514
  %v1517 = vmul.f32 %v1123, %v1515
  %v1518 = vadd.f32 %v1478, %v1516
  %v1519 = vadd.f32 %v1479, %v1517
  %v1520 = vmul.f32 %v1183, %v1518
  %v1521 = vmul.f32 %v1184, %v1519
  %v1522 = vadd.f32 %v1482, %v1520
  %v1523 = vadd.f32 %v1483, %v1521
  %v1524 = vmul.f32 %v1244, %v1522
  %v1525 = vmul.f32 %v1245, %v1523
  %v1526 = vadd.f32 %v1486, %v1490
  %v1527 = vadd.f32 %v1487, %v1491
  %v1528 = vadd.f32 %v1526, %v1524
  %v1529 = vadd.f32 %v1527, %v1525
  %v1530 = vlog2.pop %v1252
  %v1531 = vmul.f32 %v1530, 0.6931472
  %v1532 = vlog2.pop %v1253
  %v1533 = vmul.f32 %v1532, 0.6931472
  %v1534 = vlog2.pop %v1528
  %v1535 = vmul.f32 %v1534, 0.6931472
  %v1536 = vlog2.pop %v1529
  %v1537 = vmul.f32 %v1536, 0.6931472
  %v1538 = vadd.f32 %v1531, %v1535
  %v1539 = vadd.f32 %v1533, %v1537
  %v1540 = vmul.f32 %v1538, 0.05
  %v1541 = vmul.f32 %v1539, 0.05
  %1542 = vst [vmem:[%s1] sm:$0xff] %v1540
  %1543 = vst [vmem:[%s1 + $0x8] sm:$0xff] %v1541
  // Predicated region
  $region6: #{otam_matching.1} parent=0 // pred_check
    _
  $region7: #{otam_matching.1} parent=0 // pred_check_branch
    %1545 = sbr.rel (0) target = $region9
  $region8: #{otam_matching.1} parent=0 // pred_region
    _
  $region9: #{otam_matching.1} parent=0 // pred_fallthru
    _
  // Predicated region
  $region10: #{otam_matching.1} parent=0 // pred_check
    _
  $region11: #{otam_matching.1} parent=0 // pred_check_branch
    %1547 = sbr.rel (0) target = $region13
  $region12: #{otam_matching.1} parent=0 // pred_region
    _
  $region13: #{otam_matching.1} parent=0 // pred_fallthru
    _

</llo_original>
